<compile_context>
chip_gen: v7x
topology: tpu7x:2x2x1
jax: 0.10.0
libtpu: 0.0.40
codegen_flags: <defaults>
</compile_context>

<pallas_src>
import functools
import math

import jax
import jax.numpy as jnp
from jax import lax
from jax.experimental import pallas as pl
from jax.experimental.pallas import tpu as pltpu


def make_divisible(v, divisor, min_value=None):
    if min_value is None:
        min_value = divisor
    new_v = max(min_value, int(v + divisor / 2) // divisor * divisor)
    if new_v < 0.9 * v:
        new_v += divisor
    return new_v


# ------------------------------------------------------------------ kernel ---
def _sandglass_kernel(x_ref, sh_ref, dwA_w_ref, dwA_b_ref, wbd_ref, bf_ref,
                      dwD_w_ref, dwD_b_ref, o_ref, *, C):
    """Whole sandglass block on a lane-dense (rows, W*C) slab.

    rows = images_per_block * H.  Packed last-dim index is w*C + c.
    """
    x = x_ref[...].astype(jnp.float32)                      # (R, W*C)
    R, WC = x.shape
    zcol = jnp.zeros((R, C), jnp.float32)                   # zero halo column
    sh_m1 = sh_ref[0]                                       # picks row r-1
    sh_p1 = sh_ref[1]                                       # picks row r+1

    def dw3x3(v, taps):
        # taps: (9, W*C); row (dh+1)*3 + (dw+1) holds k[dh+1, dw+1, :] tiled over W.
        rows = (
            jnp.dot(sh_m1, v, preferred_element_type=jnp.float32),  # v[r-1], zero halo
            v,                                                      # v[r]
            jnp.dot(sh_p1, v, preferred_element_type=jnp.float32),  # v[r+1], zero halo
        )
        acc = None
        for i, vh in enumerate(rows):                               # i = dh + 1
            left = jnp.concatenate([zcol, vh[:, :WC - C]], axis=1)  # v[.., w-1, :]
            right = jnp.concatenate([vh[:, C:], zcol], axis=1)      # v[.., w+1, :]
            term = (left * taps[i * 3 + 0:i * 3 + 1]
                    + vh * taps[i * 3 + 1:i * 3 + 2]
                    + right * taps[i * 3 + 2:i * 3 + 3])
            acc = term if acc is None else acc + term
        return acc

    tapsA = dwA_w_ref[...]          # read each depthwise weight ref exactly once
    tapsD = dwD_w_ref[...]

    # ---- layer A: depthwise 3x3 + BN + ReLU6 --------------------------------
    tA = jnp.clip(dw3x3(x, tapsA) + dwA_b_ref[...], 0.0, 6.0)

    # ---- layers B+C fused: (1x1 reduce + BN) o (1x1 expand + BN) + ReLU6 ----
    # w_fused = w1 @ w2 applied as one block-diagonal (W*C, W*C) matmul so the
    # activations never leave the lane-dense packed layout (no relayout).
    tC = jnp.dot(tA, wbd_ref[...], preferred_element_type=jnp.float32)
    tC = jnp.clip(tC + bf_ref[...], 0.0, 6.0)

    # ---- layer D: depthwise 3x3 + BN (no activation) ------------------------
    tD = dw3x3(tC, tapsD) + dwD_b_ref[...]

    # ---- residual: stride == 1 and in_chan == out_chan ----------------------
    # TODO(synk): identity_tensor_multiplier < 1.0 (partial-channel residual)
    # and the no-residual (stride != 1 or Cin != Cout) branches are not
    # exercised by this configuration and are not implemented.
    o_ref[...] = (x + tD).astype(o_ref.dtype)


# ----------------------------------------------------------------- wrapper ---
def sandglass_block(x, p, *, n_blocks=None):
    """x: (N, H, W, C) NHWC; p: packed params from fold_params()."""
    N, H, W, Cin = x.shape
    WCin = W * Cin
    WCout = p["w_bd"].shape[1]
    Cout = WCout // W
    assert Cin == Cout, "kernel implements the residual (in_chan == out_chan) config"

    if n_blocks is None:
        # >=2 parallel grid entries keep both TensorCores of a v7x chip busy;
        # on single-TC v5e/v6e pass n_blocks=1 to fold the batch into one step.
        n_blocks = 2 if (N >= 2 and N % 2 == 0) else 1
    assert N % n_blocks == 0
    imgs = N // n_blocks
    rows = imgs * H

    # Lane-dense packing: (N, H, W, C) -> (N*H, W*C); free on contiguous NHWC.
    x2 = x.reshape(N * H, WCin)

    # +-1 row-shift matrices, block-diagonal per image -> halos are exact zeros.
    eye_imgs = jnp.eye(imgs, dtype=jnp.float32)
    sh = jnp.stack([jnp.kron(eye_imgs, jnp.eye(H, k=-1, dtype=jnp.float32)),
                    jnp.kron(eye_imgs, jnp.eye(H, k=1, dtype=jnp.float32))])

    flops = 2 * N * H * W * (9 * Cin + Cin * Cout + 9 * Cout) + N * H * W * Cout
    bytes_accessed = 4 * (int(x2.size) + N * H * WCout + int(sh.size)
                          + sum(int(v.size) for v in p.values()))

    kernel = functools.partial(_sandglass_kernel, C=Cin)

    out2 = pl.pallas_call(
        kernel,
        out_shape=jax.ShapeDtypeStruct((N * H, WCout), x.dtype),
        grid_spec=pltpu.PrefetchScalarGridSpec(
            num_scalar_prefetch=0,
            grid=(n_blocks,),
            in_specs=[
                pl.BlockSpec((rows, WCin), lambda i: (i, 0)),         # x slab
                pl.BlockSpec((2, rows, rows), lambda i: (0, 0, 0)),   # row shifts
                pl.BlockSpec((9, WCin), lambda i: (0, 0)),            # dwA taps
                pl.BlockSpec((1, WCin), lambda i: (0, 0)),            # dwA bias
                pl.BlockSpec((WCin, WCout), lambda i: (0, 0)),        # fused 1x1
                pl.BlockSpec((1, WCout), lambda i: (0, 0)),           # fused bias
                pl.BlockSpec((9, WCout), lambda i: (0, 0)),           # dwD taps
                pl.BlockSpec((1, WCout), lambda i: (0, 0)),           # dwD bias
            ],
            out_specs=pl.BlockSpec((rows, WCout), lambda i: (i, 0)),
        ),
        compiler_params=pltpu.CompilerParams(dimension_semantics=("parallel",)),
        cost_estimate=pl.CostEstimate(flops=int(flops), transcendentals=0,
                                      bytes_accessed=int(bytes_accessed)),
    )(x2, sh, p["dwA_w"], p["dwA_b"], p["w_bd"], p["bf"], p["dwD_w"], p["dwD_b"])

    return out2.reshape(N, H, W, Cout)


# ---------------------------------------------------- parameters / BN fold ---
def init_params(key, in_chan, out_chan, expand_ratio):
    hidden = in_chan // expand_ratio
    if hidden < out_chan / 6.0:
        hidden = math.ceil(out_chan / 6.0)
        hidden = make_divisible(hidden, 16)

    keys = jax.random.split(key, 8)

    def bn_params(k, c):
        k1, k2, k3, k4 = jax.random.split(k, 4)
        gamma = jax.random.uniform(k1, (c,), jnp.float32, 0.8, 1.2)
        beta = 0.1 * jax.random.normal(k2, (c,), jnp.float32)
        mean = 0.1 * jax.random.normal(k3, (c,), jnp.float32)
        var = jax.random.uniform(k4, (c,), jnp.float32, 0.5, 1.5)
        return gamma, beta, mean, var

    raw = dict(
        dwA_w=0.3 * jax.random.normal(keys[0], (3, 3, in_chan), jnp.float32),
        bnA=bn_params(keys[1], in_chan),
        w1=0.3 * jax.random.normal(keys[2], (in_chan, hidden), jnp.float32),
        bnB=bn_params(keys[3], hidden),
        w2=0.3 * jax.random.normal(keys[4], (hidden, out_chan), jnp.float32),
        bnC=bn_params(keys[5], out_chan),
        dwD_w=0.3 * jax.random.normal(keys[6], (3, 3, out_chan), jnp.float32),
        bnD=bn_params(keys[7], out_chan),
    )
    return raw, hidden


def _fold_bn(w, bn, eps=1e-5, depthwise=False):
    gamma, beta, mean, var = bn
    s = gamma / jnp.sqrt(var + eps)
    b = beta - mean * s
    w_eff = w * s if depthwise else w * s[None, :]
    return w_eff, b


def fold_params(raw, W):
    """Fold BN, fuse the two 1x1 convs, pack everything into W*C lane layout."""
    dwA_w, dwA_b = _fold_bn(raw["dwA_w"], raw["bnA"], depthwise=True)   # (3,3,Ci),(Ci,)
    w1, b1 = _fold_bn(raw["w1"], raw["bnB"])                            # (Ci,h),(h,)
    w2, b2 = _fold_bn(raw["w2"], raw["bnC"])                            # (h,Co),(Co,)
    dwD_w, dwD_b = _fold_bn(raw["dwD_w"], raw["bnD"], depthwise=True)   # (3,3,Co),(Co,)

    # Fuse 1x1 reduce + 1x1 expand (no activation between them).
    w_f = w1 @ w2                                                       # (Ci, Co)
    b_f = b1 @ w2 + b2                                                  # (Co,)

    def taps(k):      # (3,3,C) -> (9, W*C), tiled over W
        return jnp.tile(k.reshape(9, k.shape[-1]), (1, W))

    def vec(v):       # (C,) -> (1, W*C)
        return jnp.tile(v, W)[None, :]

    w_bd = jnp.kron(jnp.eye(W, dtype=w_f.dtype), w_f)                   # (W*Ci, W*Co)

    return dict(dwA_w=taps(dwA_w), dwA_b=vec(dwA_b),
                w_bd=w_bd, bf=vec(b_f),
                dwD_w=taps(dwD_w), dwD_b=vec(dwD_b))


# ------------------------------------------------------ pure-JAX reference ---
def _relu6(x):
    return jnp.clip(x, 0.0, 6.0)


def _bn(x, bn, eps=1e-5):
    gamma, beta, mean, var = bn
    return (x - mean) * (gamma / jnp.sqrt(var + eps)) + beta


def _dwconv3x3(x, w):  # x: (N,H,W,C), w: (3,3,C)
    C = x.shape[-1]
    rhs = w[:, :, None, :]  # HWIO with 1 input channel per group
    return lax.conv_general_dilated(
        x, rhs, window_strides=(1, 1), padding=((1, 1), (1, 1)),
        dimension_numbers=("NHWC", "HWIO", "NHWC"), feature_group_count=C)


def ref_forward(x, raw):
    y = _relu6(_bn(_dwconv3x3(x, raw["dwA_w"]), raw["bnA"]))
    y = _bn(jnp.einsum("nhwc,cd->nhwd", y, raw["w1"]), raw["bnB"])
    y = _relu6(_bn(jnp.einsum("nhwc,cd->nhwd", y, raw["w2"]), raw["bnC"]))
    y = _bn(_dwconv3x3(y, raw["dwD_w"]), raw["bnD"])
    return x + y


# -------------------------------------------------------------------- main ---
if __name__ == "__main__":
    key = jax.random.PRNGKey(0)
    in_chan = out_chan = 32
    expand_ratio = 2
    N, Hs, Ws = 2, 8, 8

    kx, kp = jax.random.split(key)
    x = jax.random.normal(kx, (N, Hs, Ws, in_chan), jnp.float32)  # NHWC
    raw, hidden = init_params(kp, in_chan, out_chan, expand_ratio)
    params = fold_params(raw, Ws)

    out = sandglass_block(x, params)
    out = jax.block_until_ready(out)

    ref = ref_forward(x, raw)
    assert out.shape == (N, Hs, Ws, out_chan)
    max_err = float(jnp.max(jnp.abs(out - ref)))
    assert jnp.allclose(out, ref, atol=1e-3, rtol=1e-3), max_err

    print("KERNEL_OK")
</pallas_src>

<mosaic_0001>
module attributes {stable_mosaic.version = 11 : i64} {
  func.func @_sandglass_kernel(%arg0: i32, %arg1: memref<8x256xf32, #tpu.memory_space<vmem>>, %arg2: memref<2x8x8xf32, #tpu.memory_space<vmem>>, %arg3: memref<9x256xf32, #tpu.memory_space<vmem>>, %arg4: memref<1x256xf32, #tpu.memory_space<vmem>>, %arg5: memref<256x256xf32, #tpu.memory_space<vmem>>, %arg6: memref<1x256xf32, #tpu.memory_space<vmem>>, %arg7: memref<9x256xf32, #tpu.memory_space<vmem>>, %arg8: memref<1x256xf32, #tpu.memory_space<vmem>>, %arg9: memref<8x256xf32, #tpu.memory_space<vmem>>) attributes {dimension_semantics = [#tpu.dimension_semantics<parallel>], iteration_bounds = array<i64: 2>, scalar_prefetch = 0 : i64, scratch_operands = 0 : i64, tpu.core_type = #tpu.core_type<tc>, window_params = [{transform_indices = @transform_0, window_bounds = array<i64: 8, 256>}, {pipeline_mode = #tpu.pipeline_mode<synchronous>, transform_indices = @transform_1, window_bounds = array<i64: 2, 8, 8>}, {pipeline_mode = #tpu.pipeline_mode<synchronous>, transform_indices = @transform_2, window_bounds = array<i64: 9, 256>}, {pipeline_mode = #tpu.pipeline_mode<synchronous>, transform_indices = @transform_3, window_bounds = array<i64: 1, 256>}, {pipeline_mode = #tpu.pipeline_mode<synchronous>, transform_indices = @transform_4, window_bounds = array<i64: 256, 256>}, {pipeline_mode = #tpu.pipeline_mode<synchronous>, transform_indices = @transform_5, window_bounds = array<i64: 1, 256>}, {pipeline_mode = #tpu.pipeline_mode<synchronous>, transform_indices = @transform_6, window_bounds = array<i64: 9, 256>}, {pipeline_mode = #tpu.pipeline_mode<synchronous>, transform_indices = @transform_7, window_bounds = array<i64: 1, 256>}, {transform_indices = @transform_8, window_bounds = array<i64: 8, 256>}]} {
    %c0 = arith.constant 0 : index
    %c0_0 = arith.constant 0 : index
    %0 = vector.load %arg1[%c0, %c0_0] : memref<8x256xf32, #tpu.memory_space<vmem>>, vector<8x256xf32>
    %cst = arith.constant 0.000000e+00 : f32
    %1 = vector.broadcast %cst : f32 to vector<8x32xf32>
    %c0_1 = arith.constant 0 : index
    %c0_2 = arith.constant 0 : index
    %c0_3 = arith.constant 0 : index
    %2 = vector.load %arg2[%c0_1, %c0_2, %c0_3] : memref<2x8x8xf32, #tpu.memory_space<vmem>>, vector<1x8x8xf32>
    %3 = vector.shape_cast %2 : vector<1x8x8xf32> to vector<8x8xf32>
    %c1 = arith.constant 1 : index
    %c0_4 = arith.constant 0 : index
    %c0_5 = arith.constant 0 : index
    %4 = vector.load %arg2[%c1, %c0_4, %c0_5] : memref<2x8x8xf32, #tpu.memory_space<vmem>>, vector<1x8x8xf32>
    %5 = vector.shape_cast %4 : vector<1x8x8xf32> to vector<8x8xf32>
    %c0_6 = arith.constant 0 : index
    %c0_7 = arith.constant 0 : index
    %6 = vector.load %arg3[%c0_6, %c0_7] : memref<9x256xf32, #tpu.memory_space<vmem>>, vector<9x256xf32>
    %c0_8 = arith.constant 0 : index
    %c0_9 = arith.constant 0 : index
    %7 = vector.load %arg7[%c0_8, %c0_9] : memref<9x256xf32, #tpu.memory_space<vmem>>, vector<9x256xf32>
    %cst_10 = arith.constant dense<0.000000e+00> : vector<8x256xf32>
    %8 = tpu.matmul %3, %0, %cst_10 {dimension_numbers = #tpu.dot_dimension_numbers<[1], [0], [0], [1], [0, 0, 1, 1], [], []>} : vector<8x8xf32>, vector<8x256xf32>, vector<8x256xf32> -> vector<8x256xf32>
    %cst_11 = arith.constant dense<0.000000e+00> : vector<8x256xf32>
    %9 = tpu.matmul %5, %0, %cst_11 {dimension_numbers = #tpu.dot_dimension_numbers<[1], [0], [0], [1], [0, 0, 1, 1], [], []>} : vector<8x8xf32>, vector<8x256xf32>, vector<8x256xf32> -> vector<8x256xf32>
    %10 = vector.extract_strided_slice %8 {offsets = [0, 0], sizes = [8, 224], strides = [1, 1]} : vector<8x256xf32> to vector<8x224xf32>
    %11 = tpu.concatenate %1, %10 in 1 : vector<8x32xf32>, vector<8x224xf32> -> vector<8x256xf32>
    %12 = vector.extract_strided_slice %8 {offsets = [0, 32], sizes = [8, 224], strides = [1, 1]} : vector<8x256xf32> to vector<8x224xf32>
    %13 = tpu.concatenate %12, %1 in 1 : vector<8x224xf32>, vector<8x32xf32> -> vector<8x256xf32>
    %14 = vector.extract_strided_slice %6 {offsets = [0, 0], sizes = [1, 256], strides = [1, 1]} : vector<9x256xf32> to vector<1x256xf32>
    %15 = vector.broadcast %14 : vector<1x256xf32> to vector<8x256xf32>
    %16 = arith.mulf %11, %15 : vector<8x256xf32>
    %17 = vector.extract_strided_slice %6 {offsets = [1, 0], sizes = [1, 256], strides = [1, 1]} : vector<9x256xf32> to vector<1x256xf32>
    %18 = vector.broadcast %17 : vector<1x256xf32> to vector<8x256xf32>
    %19 = arith.mulf %8, %18 : vector<8x256xf32>
    %20 = arith.addf %16, %19 : vector<8x256xf32>
    %21 = vector.extract_strided_slice %6 {offsets = [2, 0], sizes = [1, 256], strides = [1, 1]} : vector<9x256xf32> to vector<1x256xf32>
    %22 = vector.broadcast %21 : vector<1x256xf32> to vector<8x256xf32>
    %23 = arith.mulf %13, %22 : vector<8x256xf32>
    %24 = arith.addf %20, %23 : vector<8x256xf32>
    %25 = vector.extract_strided_slice %0 {offsets = [0, 0], sizes = [8, 224], strides = [1, 1]} : vector<8x256xf32> to vector<8x224xf32>
    %26 = tpu.concatenate %1, %25 in 1 : vector<8x32xf32>, vector<8x224xf32> -> vector<8x256xf32>
    %27 = vector.extract_strided_slice %0 {offsets = [0, 32], sizes = [8, 224], strides = [1, 1]} : vector<8x256xf32> to vector<8x224xf32>
    %28 = tpu.concatenate %27, %1 in 1 : vector<8x224xf32>, vector<8x32xf32> -> vector<8x256xf32>
    %29 = vector.extract_strided_slice %6 {offsets = [3, 0], sizes = [1, 256], strides = [1, 1]} : vector<9x256xf32> to vector<1x256xf32>
    %30 = vector.broadcast %29 : vector<1x256xf32> to vector<8x256xf32>
    %31 = arith.mulf %26, %30 : vector<8x256xf32>
    %32 = vector.extract_strided_slice %6 {offsets = [4, 0], sizes = [1, 256], strides = [1, 1]} : vector<9x256xf32> to vector<1x256xf32>
    %33 = vector.broadcast %32 : vector<1x256xf32> to vector<8x256xf32>
    %34 = arith.mulf %0, %33 : vector<8x256xf32>
    %35 = arith.addf %31, %34 : vector<8x256xf32>
    %36 = vector.extract_strided_slice %6 {offsets = [5, 0], sizes = [1, 256], strides = [1, 1]} : vector<9x256xf32> to vector<1x256xf32>
    %37 = vector.broadcast %36 : vector<1x256xf32> to vector<8x256xf32>
    %38 = arith.mulf %28, %37 : vector<8x256xf32>
    %39 = arith.addf %35, %38 : vector<8x256xf32>
    %40 = arith.addf %24, %39 : vector<8x256xf32>
    %41 = vector.extract_strided_slice %9 {offsets = [0, 0], sizes = [8, 224], strides = [1, 1]} : vector<8x256xf32> to vector<8x224xf32>
    %42 = tpu.concatenate %1, %41 in 1 : vector<8x32xf32>, vector<8x224xf32> -> vector<8x256xf32>
    %43 = vector.extract_strided_slice %9 {offsets = [0, 32], sizes = [8, 224], strides = [1, 1]} : vector<8x256xf32> to vector<8x224xf32>
    %44 = tpu.concatenate %43, %1 in 1 : vector<8x224xf32>, vector<8x32xf32> -> vector<8x256xf32>
    %45 = vector.extract_strided_slice %6 {offsets = [6, 0], sizes = [1, 256], strides = [1, 1]} : vector<9x256xf32> to vector<1x256xf32>
    %46 = vector.broadcast %45 : vector<1x256xf32> to vector<8x256xf32>
    %47 = arith.mulf %42, %46 : vector<8x256xf32>
    %48 = vector.extract_strided_slice %6 {offsets = [7, 0], sizes = [1, 256], strides = [1, 1]} : vector<9x256xf32> to vector<1x256xf32>
    %49 = vector.broadcast %48 : vector<1x256xf32> to vector<8x256xf32>
    %50 = arith.mulf %9, %49 : vector<8x256xf32>
    %51 = arith.addf %47, %50 : vector<8x256xf32>
    %52 = vector.extract_strided_slice %6 {offsets = [8, 0], sizes = [1, 256], strides = [1, 1]} : vector<9x256xf32> to vector<1x256xf32>
    %53 = vector.broadcast %52 : vector<1x256xf32> to vector<8x256xf32>
    %54 = arith.mulf %44, %53 : vector<8x256xf32>
    %55 = arith.addf %51, %54 : vector<8x256xf32>
    %56 = arith.addf %40, %55 : vector<8x256xf32>
    %c0_12 = arith.constant 0 : index
    %c0_13 = arith.constant 0 : index
    %57 = vector.load %arg4[%c0_12, %c0_13] : memref<1x256xf32, #tpu.memory_space<vmem>>, vector<1x256xf32>
    %58 = vector.broadcast %57 : vector<1x256xf32> to vector<8x256xf32>
    %59 = arith.addf %56, %58 : vector<8x256xf32>
    %cst_14 = arith.constant 0.000000e+00 : f32
    %cst_15 = arith.constant 6.000000e+00 : f32
    %60 = vector.broadcast %cst_14 : f32 to vector<8x256xf32>
    %61 = arith.maximumf %60, %59 : vector<8x256xf32>
    %62 = vector.broadcast %cst_15 : f32 to vector<8x256xf32>
    %63 = arith.minimumf %62, %61 : vector<8x256xf32>
    %c0_16 = arith.constant 0 : index
    %c0_17 = arith.constant 0 : index
    %64 = vector.load %arg5[%c0_16, %c0_17] : memref<256x256xf32, #tpu.memory_space<vmem>>, vector<256x256xf32>
    %cst_18 = arith.constant dense<0.000000e+00> : vector<8x256xf32>
    %65 = tpu.matmul %63, %64, %cst_18 {dimension_numbers = #tpu.dot_dimension_numbers<[1], [0], [0], [1], [0, 0, 1, 1], [], []>} : vector<8x256xf32>, vector<256x256xf32>, vector<8x256xf32> -> vector<8x256xf32>
    %c0_19 = arith.constant 0 : index
    %c0_20 = arith.constant 0 : index
    %66 = vector.load %arg6[%c0_19, %c0_20] : memref<1x256xf32, #tpu.memory_space<vmem>>, vector<1x256xf32>
    %67 = vector.broadcast %66 : vector<1x256xf32> to vector<8x256xf32>
    %68 = arith.addf %65, %67 : vector<8x256xf32>
    %cst_21 = arith.constant 0.000000e+00 : f32
    %cst_22 = arith.constant 6.000000e+00 : f32
    %69 = vector.broadcast %cst_21 : f32 to vector<8x256xf32>
    %70 = arith.maximumf %69, %68 : vector<8x256xf32>
    %71 = vector.broadcast %cst_22 : f32 to vector<8x256xf32>
    %72 = arith.minimumf %71, %70 : vector<8x256xf32>
    %cst_23 = arith.constant dense<0.000000e+00> : vector<8x256xf32>
    %73 = tpu.matmul %3, %72, %cst_23 {dimension_numbers = #tpu.dot_dimension_numbers<[1], [0], [0], [1], [0, 0, 1, 1], [], []>} : vector<8x8xf32>, vector<8x256xf32>, vector<8x256xf32> -> vector<8x256xf32>
    %cst_24 = arith.constant dense<0.000000e+00> : vector<8x256xf32>
    %74 = tpu.matmul %5, %72, %cst_24 {dimension_numbers = #tpu.dot_dimension_numbers<[1], [0], [0], [1], [0, 0, 1, 1], [], []>} : vector<8x8xf32>, vector<8x256xf32>, vector<8x256xf32> -> vector<8x256xf32>
    %75 = vector.extract_strided_slice %73 {offsets = [0, 0], sizes = [8, 224], strides = [1, 1]} : vector<8x256xf32> to vector<8x224xf32>
    %76 = tpu.concatenate %1, %75 in 1 : vector<8x32xf32>, vector<8x224xf32> -> vector<8x256xf32>
    %77 = vector.extract_strided_slice %73 {offsets = [0, 32], sizes = [8, 224], strides = [1, 1]} : vector<8x256xf32> to vector<8x224xf32>
    %78 = tpu.concatenate %77, %1 in 1 : vector<8x224xf32>, vector<8x32xf32> -> vector<8x256xf32>
    %79 = vector.extract_strided_slice %7 {offsets = [0, 0], sizes = [1, 256], strides = [1, 1]} : vector<9x256xf32> to vector<1x256xf32>
    %80 = vector.broadcast %79 : vector<1x256xf32> to vector<8x256xf32>
    %81 = arith.mulf %76, %80 : vector<8x256xf32>
    %82 = vector.extract_strided_slice %7 {offsets = [1, 0], sizes = [1, 256], strides = [1, 1]} : vector<9x256xf32> to vector<1x256xf32>
    %83 = vector.broadcast %82 : vector<1x256xf32> to vector<8x256xf32>
    %84 = arith.mulf %73, %83 : vector<8x256xf32>
    %85 = arith.addf %81, %84 : vector<8x256xf32>
    %86 = vector.extract_strided_slice %7 {offsets = [2, 0], sizes = [1, 256], strides = [1, 1]} : vector<9x256xf32> to vector<1x256xf32>
    %87 = vector.broadcast %86 : vector<1x256xf32> to vector<8x256xf32>
    %88 = arith.mulf %78, %87 : vector<8x256xf32>
    %89 = arith.addf %85, %88 : vector<8x256xf32>
    %90 = vector.extract_strided_slice %72 {offsets = [0, 0], sizes = [8, 224], strides = [1, 1]} : vector<8x256xf32> to vector<8x224xf32>
    %91 = tpu.concatenate %1, %90 in 1 : vector<8x32xf32>, vector<8x224xf32> -> vector<8x256xf32>
    %92 = vector.extract_strided_slice %72 {offsets = [0, 32], sizes = [8, 224], strides = [1, 1]} : vector<8x256xf32> to vector<8x224xf32>
    %93 = tpu.concatenate %92, %1 in 1 : vector<8x224xf32>, vector<8x32xf32> -> vector<8x256xf32>
    %94 = vector.extract_strided_slice %7 {offsets = [3, 0], sizes = [1, 256], strides = [1, 1]} : vector<9x256xf32> to vector<1x256xf32>
    %95 = vector.broadcast %94 : vector<1x256xf32> to vector<8x256xf32>
    %96 = arith.mulf %91, %95 : vector<8x256xf32>
    %97 = vector.extract_strided_slice %7 {offsets = [4, 0], sizes = [1, 256], strides = [1, 1]} : vector<9x256xf32> to vector<1x256xf32>
    %98 = vector.broadcast %97 : vector<1x256xf32> to vector<8x256xf32>
    %99 = arith.mulf %72, %98 : vector<8x256xf32>
    %100 = arith.addf %96, %99 : vector<8x256xf32>
    %101 = vector.extract_strided_slice %7 {offsets = [5, 0], sizes = [1, 256], strides = [1, 1]} : vector<9x256xf32> to vector<1x256xf32>
    %102 = vector.broadcast %101 : vector<1x256xf32> to vector<8x256xf32>
    %103 = arith.mulf %93, %102 : vector<8x256xf32>
    %104 = arith.addf %100, %103 : vector<8x256xf32>
    %105 = arith.addf %89, %104 : vector<8x256xf32>
    %106 = vector.extract_strided_slice %74 {offsets = [0, 0], sizes = [8, 224], strides = [1, 1]} : vector<8x256xf32> to vector<8x224xf32>
    %107 = tpu.concatenate %1, %106 in 1 : vector<8x32xf32>, vector<8x224xf32> -> vector<8x256xf32>
    %108 = vector.extract_strided_slice %74 {offsets = [0, 32], sizes = [8, 224], strides = [1, 1]} : vector<8x256xf32> to vector<8x224xf32>
    %109 = tpu.concatenate %108, %1 in 1 : vector<8x224xf32>, vector<8x32xf32> -> vector<8x256xf32>
    %110 = vector.extract_strided_slice %7 {offsets = [6, 0], sizes = [1, 256], strides = [1, 1]} : vector<9x256xf32> to vector<1x256xf32>
    %111 = vector.broadcast %110 : vector<1x256xf32> to vector<8x256xf32>
    %112 = arith.mulf %107, %111 : vector<8x256xf32>
    %113 = vector.extract_strided_slice %7 {offsets = [7, 0], sizes = [1, 256], strides = [1, 1]} : vector<9x256xf32> to vector<1x256xf32>
    %114 = vector.broadcast %113 : vector<1x256xf32> to vector<8x256xf32>
    %115 = arith.mulf %74, %114 : vector<8x256xf32>
    %116 = arith.addf %112, %115 : vector<8x256xf32>
    %117 = vector.extract_strided_slice %7 {offsets = [8, 0], sizes = [1, 256], strides = [1, 1]} : vector<9x256xf32> to vector<1x256xf32>
    %118 = vector.broadcast %117 : vector<1x256xf32> to vector<8x256xf32>
    %119 = arith.mulf %109, %118 : vector<8x256xf32>
    %120 = arith.addf %116, %119 : vector<8x256xf32>
    %121 = arith.addf %105, %120 : vector<8x256xf32>
    %c0_25 = arith.constant 0 : index
    %c0_26 = arith.constant 0 : index
    %122 = vector.load %arg8[%c0_25, %c0_26] : memref<1x256xf32, #tpu.memory_space<vmem>>, vector<1x256xf32>
    %123 = vector.broadcast %122 : vector<1x256xf32> to vector<8x256xf32>
    %124 = arith.addf %121, %123 : vector<8x256xf32>
    %125 = arith.addf %0, %124 : vector<8x256xf32>
    %c0_27 = arith.constant 0 : index
    %c0_28 = arith.constant 0 : index
    %126 = vector.load %arg9[%c0_27, %c0_28] : memref<8x256xf32, #tpu.memory_space<vmem>>, vector<8x256xf32>
    tpu.vector_store %arg9[%c0_27, %c0_28], %125 {strides = array<i32>} : memref<8x256xf32, #tpu.memory_space<vmem>>, vector<8x256xf32>,
    return
  }
  func.func @transform_0(%arg0: i32) -> (i32, i32) {
    %c0_i32 = arith.constant 0 : i32
    %c0_i32_0 = arith.constant 0 : i32
    return %arg0, %c0_i32 : i32, i32
  }
  func.func @transform_1(%arg0: i32) -> (i32, i32, i32) {
    %c0_i32 = arith.constant 0 : i32
    %c0_i32_0 = arith.constant 0 : i32
    %c0_i32_1 = arith.constant 0 : i32
    %c0_i32_2 = arith.constant 0 : i32
    return %c0_i32, %c0_i32_0, %c0_i32_1 : i32, i32, i32
  }
  func.func @transform_2(%arg0: i32) -> (i32, i32) {
    %c0_i32 = arith.constant 0 : i32
    %c0_i32_0 = arith.constant 0 : i32
    %c0_i32_1 = arith.constant 0 : i32
    return %c0_i32, %c0_i32_0 : i32, i32
  }
  func.func @transform_3(%arg0: i32) -> (i32, i32) {
    %c0_i32 = arith.constant 0 : i32
    %c0_i32_0 = arith.constant 0 : i32
    %c0_i32_1 = arith.constant 0 : i32
    return %c0_i32, %c0_i32_0 : i32, i32
  }
  func.func @transform_4(%arg0: i32) -> (i32, i32) {
    %c0_i32 = arith.constant 0 : i32
    %c0_i32_0 = arith.constant 0 : i32
    %c0_i32_1 = arith.constant 0 : i32
    return %c0_i32, %c0_i32_0 : i32, i32
  }
  func.func @transform_5(%arg0: i32) -> (i32, i32) {
    %c0_i32 = arith.constant 0 : i32
    %c0_i32_0 = arith.constant 0 : i32
    %c0_i32_1 = arith.constant 0 : i32
    return %c0_i32, %c0_i32_0 : i32, i32
  }
  func.func @transform_6(%arg0: i32) -> (i32, i32) {
    %c0_i32 = arith.constant 0 : i32
    %c0_i32_0 = arith.constant 0 : i32
    %c0_i32_1 = arith.constant 0 : i32
    return %c0_i32, %c0_i32_0 : i32, i32
  }
  func.func @transform_7(%arg0: i32) -> (i32, i32) {
    %c0_i32 = arith.constant 0 : i32
    %c0_i32_0 = arith.constant 0 : i32
    %c0_i32_1 = arith.constant 0 : i32
    return %c0_i32, %c0_i32_0 : i32, i32
  }
  func.func @transform_8(%arg0: i32) -> (i32, i32) {
    %c0_i32 = arith.constant 0 : i32
    %c0_i32_0 = arith.constant 0 : i32
    return %arg0, %c0_i32 : i32, i32
  }
}

</mosaic_0001>

<llo_original>
// kernel: tpu_custom_call.1
$region0: #{tpu_custom_call.1}
  #allocation0 [shape = 'u32[]', space=smem, size = 0x4, offset = 0x4, fixed_abs, tag = 'smem constant byte address 0x4 - core index']
  #allocation1 [shape = 'u32[144,128]{1,0:T(1,128)}', space=vmem, size = 0x12000, scoped, tag = 'internal scratch']
  %s0 = inlined_call_operand.hbm [shape: f32[16,256], index: 0, kind: input, shape index: {}]
  %s1 = inlined_call_operand.hbm [shape: f32[2,8,8], index: 1, kind: input, shape index: {}]
  %s2 = inlined_call_operand.hbm [shape: f32[9,256], index: 2, kind: input, shape index: {}]
  %s3 = inlined_call_operand.vmem [shape: f32[1,256], index: 3, kind: input, shape index: {}]
  %s4 = inlined_call_operand.hbm [shape: f32[256,256], index: 4, kind: input, shape index: {}]
  %s5 = inlined_call_operand.vmem [shape: f32[1,256], index: 5, kind: input, shape index: {}]
  %s6 = inlined_call_operand.hbm [shape: f32[9,256], index: 6, kind: input, shape index: {}]
  %s7 = inlined_call_operand.vmem [shape: f32[1,256], index: 7, kind: input, shape index: {}]
  %s8 = inlined_call_operand.hbm [shape: f32[16,256], index: 8, kind: output, shape index: {}]
  %s9 = sld [smem:[#allocation0]]
  $region85: #{tpu_custom_call.1} parent=0
    _
  %s11 = ssub.s32 1, %s9
  %s12 = scalar_select 0, %s11, %s9
  $region1: #{tpu_custom_call.1} parent=0
    #allocation2 [shape = 'u8[16384]{0}', space=vmem, size = 0x4000, scoped, tag = 'input window, operand 0']
    #allocation3 [shape = 's32[2]{0}', space=sflag, size = 0x8, scoped, tag = 'scoped memory for tpu_custom_call.1']
    #allocation4 [shape = 's32[2]{0}', space=sflag, size = 0x8, scoped, tag = 'scoped memory for tpu_custom_call.1']
    #allocation5 [shape = 'u8[8192]{0}', space=vmem, size = 0x2000, scoped, tag = 'input window, operand 1, single buffered']
    #allocation6 [shape = 's32[1]{0}', space=sflag, size = 0x4, scoped, tag = 'scoped memory for tpu_custom_call.1']
    #allocation7 [shape = 'u8[16384]{0}', space=vmem, size = 0x4000, scoped, tag = 'input window, operand 2, single buffered']
    #allocation8 [shape = 'u8[262144]{0}', space=vmem, size = 0x40000, scoped, tag = 'input window, operand 4, single buffered']
    #allocation9 [shape = 's32[1]{0}', space=sflag, size = 0x4, scoped, tag = 'scoped memory for tpu_custom_call.1']
    #allocation10 [shape = 'u8[16384]{0}', space=vmem, size = 0x4000, scoped, tag = 'input window, operand 6, single buffered']
    #allocation11 [shape = 'u8[16384]{0}', space=vmem, size = 0x4000, scoped, tag = 'output window, operand 0']
    %13 = vsyncpa [#allocation3], 0
    %s14 = scalar_lea.sflag [#allocation3], 1
    %15 = vsyncpa %s14, 0
    %16 = vsyncpa [#allocation6], 0
    %17 = vsyncpa [#allocation9], 0
    %18 = vsyncpa [#allocation4], 0
    %s19 = scalar_lea.sflag [#allocation4], 1
    %20 = vsyncpa %s19, 0
    loop: start=0, step=1, limit=4
    $region2: #{tpu_custom_call.1} parent=1 // loop_pre_header
      _
    $region3: #{tpu_custom_call.1} parent=1 // loop_header
      %s22 = sphi 0, %s26
      %p23 = scmp.ge.s32.totalorder %s22, 4
      %s32 = sphi 0, %s34
      %s35 = sphi 0, %s32
      %s36 = sphi 0, %s35
      %s52 = sphi 0, %s36
      %s56 = sphi 0, %s56
      %s58 = sphi 0, %s56
      %s59 = sphi 0, %s58
      %s73 = sphi 0, %s59
      %s77 = sphi 0, %s77
      %s79 = sphi 0, %s77
      %s80 = sphi 0, %s79
      %s94 = sphi 0, %s80
      %s98 = sphi 0, %s98
      %s100 = sphi 0, %s98
      %s101 = sphi 0, %s100
      %s115 = sphi 0, %s101
      %s119 = sphi 0, %s119
      %s121 = sphi 0, %s119
      %s122 = sphi 0, %s121
      %s136 = sphi 0, %s122
      %s140 = sphi 0, %s140
      %s142 = sphi 0, %s140
      %s143 = sphi 0, %s142
      %s157 = sphi 0, %s143
      %s161 = sphi 0, %s161
      %s163 = sphi 0, %s161
      %s164 = sphi 0, %s163
      %s178 = sphi 0, %s164
      %s182 = sphi 0, %s182
      %s184 = sphi 0, %s182
      %s185 = sphi 0, %s184
      %s199 = sphi 0, %s185
      %s205 = sphi 0, %s207
      %s208 = sphi 0, %s205
      %s209 = sphi 0, %s208
      %s225 = sphi 0, %s209
    $region4: #{tpu_custom_call.1} parent=1 // loop_header_branch
      %25 = sbr.rel (%p23) target = $region8
    $region5: #{tpu_custom_call.1} parent=1 // loop_body
      %s27 = ssub.s32 %s22, 1
      %s28 = ssub.s32 %s22, 2
      %s29 = sadd.s32 %s22, 1
      %s30 = ssub.s32 %s22, %s29
      %p31 = scmp.eq.s32.totalorder %s30, 0
      %s33 = sadd.s32 %s32, 1
      %s34 = scalar_select %p31, %s32, %s33
      %p37 = pneg %p31
      %p38 = scmp.eq.s32.totalorder %s22, 1
      %p39 = por %p37, %p38
      %p40 = scmp.ne.s32.totalorder %s32, %s35
      %p41 = scmp.eq.s32.totalorder %s22, 0
      %p42 = por %p40, %p41
      %p43 = scmp.ne.s32.totalorder %s32, %s35
      %p44 = scmp.eq.s32.totalorder %s27, 1
      %p45 = por %p43, %p44
      %p46 = scmp.ne.s32.totalorder %s35, %s36
      %p47 = scmp.eq.s32.totalorder %s27, 0
      %p48 = por %p46, %p47
      %p49 = scmp.ne.s32.totalorder %s35, %s36
      %p50 = scmp.eq.s32.totalorder %s28, 1
      %p51 = por %p49, %p50
      %p53 = scmp.ne.s32.totalorder %s36, %s52
      %p54 = scmp.eq.s32.totalorder %s28, 0
      %p55 = por %p53, %p54
      %s57 = sadd.s32 %s56, 1
      %p60 = scmp.eq.s32.totalorder %s22, 1
      %p61 = scmp.ne.s32.totalorder %s56, %s58
      %p62 = scmp.eq.s32.totalorder %s22, 0
      %p63 = por %p61, %p62
      %p64 = scmp.ne.s32.totalorder %s56, %s58
      %p65 = scmp.eq.s32.totalorder %s27, 1
      %p66 = por %p64, %p65
      %p67 = scmp.ne.s32.totalorder %s58, %s59
      %p68 = scmp.eq.s32.totalorder %s27, 0
      %p69 = por %p67, %p68
      %p70 = scmp.ne.s32.totalorder %s58, %s59
      %p71 = scmp.eq.s32.totalorder %s28, 1
      %p72 = por %p70, %p71
      %p74 = scmp.ne.s32.totalorder %s59, %s73
      %p75 = scmp.eq.s32.totalorder %s28, 0
      %p76 = por %p74, %p75
      %s78 = sadd.s32 %s77, 1
      %p81 = scmp.eq.s32.totalorder %s22, 1
      %p82 = scmp.ne.s32.totalorder %s77, %s79
      %p83 = scmp.eq.s32.totalorder %s22, 0
      %p84 = por %p82, %p83
      %p85 = scmp.ne.s32.totalorder %s77, %s79
      %p86 = scmp.eq.s32.totalorder %s27, 1
      %p87 = por %p85, %p86
      %p88 = scmp.ne.s32.totalorder %s79, %s80
      %p89 = scmp.eq.s32.totalorder %s27, 0
      %p90 = por %p88, %p89
      %p91 = scmp.ne.s32.totalorder %s79, %s80
      %p92 = scmp.eq.s32.totalorder %s28, 1
      %p93 = por %p91, %p92
      %p95 = scmp.ne.s32.totalorder %s80, %s94
      %p96 = scmp.eq.s32.totalorder %s28, 0
      %p97 = por %p95, %p96
      %s99 = sadd.s32 %s98, 1
      %p102 = scmp.eq.s32.totalorder %s22, 1
      %p103 = scmp.ne.s32.totalorder %s98, %s100
      %p104 = scmp.eq.s32.totalorder %s22, 0
      %p105 = por %p103, %p104
      %p106 = scmp.ne.s32.totalorder %s98, %s100
      %p107 = scmp.eq.s32.totalorder %s27, 1
      %p108 = por %p106, %p107
      %p109 = scmp.ne.s32.totalorder %s100, %s101
      %p110 = scmp.eq.s32.totalorder %s27, 0
      %p111 = por %p109, %p110
      %p112 = scmp.ne.s32.totalorder %s100, %s101
      %p113 = scmp.eq.s32.totalorder %s28, 1
      %p114 = por %p112, %p113
      %p116 = scmp.ne.s32.totalorder %s101, %s115
      %p117 = scmp.eq.s32.totalorder %s28, 0
      %p118 = por %p116, %p117
      %s120 = sadd.s32 %s119, 1
      %p123 = scmp.eq.s32.totalorder %s22, 1
      %p124 = scmp.ne.s32.totalorder %s119, %s121
      %p125 = scmp.eq.s32.totalorder %s22, 0
      %p126 = por %p124, %p125
      %p127 = scmp.ne.s32.totalorder %s119, %s121
      %p128 = scmp.eq.s32.totalorder %s27, 1
      %p129 = por %p127, %p128
      %p130 = scmp.ne.s32.totalorder %s121, %s122
      %p131 = scmp.eq.s32.totalorder %s27, 0
      %p132 = por %p130, %p131
      %p133 = scmp.ne.s32.totalorder %s121, %s122
      %p134 = scmp.eq.s32.totalorder %s28, 1
      %p135 = por %p133, %p134
      %p137 = scmp.ne.s32.totalorder %s122, %s136
      %p138 = scmp.eq.s32.totalorder %s28, 0
      %p139 = por %p137, %p138
      %s141 = sadd.s32 %s140, 1
      %p144 = scmp.eq.s32.totalorder %s22, 1
      %p145 = scmp.ne.s32.totalorder %s140, %s142
      %p146 = scmp.eq.s32.totalorder %s22, 0
      %p147 = por %p145, %p146
      %p148 = scmp.ne.s32.totalorder %s140, %s142
      %p149 = scmp.eq.s32.totalorder %s27, 1
      %p150 = por %p148, %p149
      %p151 = scmp.ne.s32.totalorder %s142, %s143
      %p152 = scmp.eq.s32.totalorder %s27, 0
      %p153 = por %p151, %p152
      %p154 = scmp.ne.s32.totalorder %s142, %s143
      %p155 = scmp.eq.s32.totalorder %s28, 1
      %p156 = por %p154, %p155
      %p158 = scmp.ne.s32.totalorder %s143, %s157
      %p159 = scmp.eq.s32.totalorder %s28, 0
      %p160 = por %p158, %p159
      %s162 = sadd.s32 %s161, 1
      %p165 = scmp.eq.s32.totalorder %s22, 1
      %p166 = scmp.ne.s32.totalorder %s161, %s163
      %p167 = scmp.eq.s32.totalorder %s22, 0
      %p168 = por %p166, %p167
      %p169 = scmp.ne.s32.totalorder %s161, %s163
      %p170 = scmp.eq.s32.totalorder %s27, 1
      %p171 = por %p169, %p170
      %p172 = scmp.ne.s32.totalorder %s163, %s164
      %p173 = scmp.eq.s32.totalorder %s27, 0
      %p174 = por %p172, %p173
      %p175 = scmp.ne.s32.totalorder %s163, %s164
      %p176 = scmp.eq.s32.totalorder %s28, 1
      %p177 = por %p175, %p176
      %p179 = scmp.ne.s32.totalorder %s164, %s178
      %p180 = scmp.eq.s32.totalorder %s28, 0
      %p181 = por %p179, %p180
      %s183 = sadd.s32 %s182, 1
      %p186 = scmp.eq.s32.totalorder %s22, 1
      %p187 = scmp.ne.s32.totalorder %s182, %s184
      %p188 = scmp.eq.s32.totalorder %s22, 0
      %p189 = por %p187, %p188
      %p190 = scmp.ne.s32.totalorder %s182, %s184
      %p191 = scmp.eq.s32.totalorder %s27, 1
      %p192 = por %p190, %p191
      %p193 = scmp.ne.s32.totalorder %s184, %s185
      %p194 = scmp.eq.s32.totalorder %s27, 0
      %p195 = por %p193, %p194
      %p196 = scmp.ne.s32.totalorder %s184, %s185
      %p197 = scmp.eq.s32.totalorder %s28, 1
      %p198 = por %p196, %p197
      %p200 = scmp.ne.s32.totalorder %s185, %s199
      %p201 = scmp.eq.s32.totalorder %s28, 0
      %p202 = por %p200, %p201
      %s203 = ssub.s32 %s22, %s29
      %p204 = scmp.eq.s32.totalorder %s203, 0
      %s206 = sadd.s32 %s205, 1
      %s207 = scalar_select %p204, %s205, %s206
      %p210 = pneg %p204
      %p211 = scmp.eq.s32.totalorder %s22, 1
      %p212 = por %p210, %p211
      %p213 = scmp.ne.s32.totalorder %s205, %s208
      %p214 = scmp.eq.s32.totalorder %s22, 0
      %p215 = por %p213, %p214
      %p216 = scmp.ne.s32.totalorder %s205, %s208
      %p217 = scmp.eq.s32.totalorder %s27, 1
      %p218 = por %p216, %p217
      %p219 = scmp.ne.s32.totalorder %s208, %s209
      %p220 = scmp.eq.s32.totalorder %s27, 0
      %p221 = por %p219, %p220
      %p222 = scmp.ne.s32.totalorder %s208, %s209
      %p223 = scmp.eq.s32.totalorder %s28, 1
      %p224 = por %p222, %p223
      %p226 = scmp.ne.s32.totalorder %s209, %s225
      %p227 = scmp.eq.s32.totalorder %s28, 0
      %p228 = por %p226, %p227
      %p229 = scmp.le.s32.totalorder 1, %s22
      %p230 = scmp.lt.s32.totalorder %s22, 3
      %p231 = pnand %p229, %p230
      %p232 = pneg %p231
      // Predicated region
      $region9: #{tpu_custom_call.1} parent=5 // pred_check
        _
      $region10: #{tpu_custom_call.1} parent=5 // pred_check_branch
        %234 = sbr.rel (%p231) target = $region12
      $region11: #{tpu_custom_call.1} parent=5 // pred_region
        %s235 = ssub.s32 %s22, 1
        // Predicated region
        $region13: #{tpu_custom_call.1} parent=11 // pred_check
          %p236 = pneg %p69
        $region14: #{tpu_custom_call.1} parent=11 // pred_check_branch
          %238 = sbr.rel (%p236) target = $region16
        $region15: #{tpu_custom_call.1} parent=11 // pred_region
          %s240 = ssub.s32 256, 256
          %241 = vsyncadd [#allocation6], %s240
          %s242 = sshll.u32 [#allocation5], 4
          %s243 = int_to_ptr.vmem [resolvable:$true] %s242
          %248 = dma.hbm_to_vmem [thread:$0]  %s1, 256, %s243, [#allocation6], 128, 128, 8
        $region16: #{tpu_custom_call.1} parent=11 // pred_fallthru
          _
        // Predicated region
        $region17: #{tpu_custom_call.1} parent=11 // pred_check
          %p249 = pneg %p90
        $region18: #{tpu_custom_call.1} parent=11 // pred_check_branch
          %251 = sbr.rel (%p249) target = $region20
        $region19: #{tpu_custom_call.1} parent=11 // pred_region
          %s253 = ssub.s32 512, 512
          %254 = vsyncadd [#allocation6], %s253
          %s255 = sshll.u32 [#allocation7], 4
          %s256 = int_to_ptr.vmem [resolvable:$true] %s255
          %261 = dma.hbm_to_vmem [thread:$0]  %s2, 512, %s256, [#allocation6], 256, 256, 16
        $region20: #{tpu_custom_call.1} parent=11 // pred_fallthru
          _
        // Predicated region
        $region21: #{tpu_custom_call.1} parent=11 // pred_check
          %p262 = pneg %p111
        $region22: #{tpu_custom_call.1} parent=11 // pred_check_branch
          %264 = sbr.rel (%p262) target = $region24
        $region23: #{tpu_custom_call.1} parent=11 // pred_region
          _
        $region24: #{tpu_custom_call.1} parent=11 // pred_fallthru
          _
        // Predicated region
        $region25: #{tpu_custom_call.1} parent=11 // pred_check
          %p265 = pneg %p132
        $region26: #{tpu_custom_call.1} parent=11 // pred_check_branch
          %267 = sbr.rel (%p265) target = $region28
        $region27: #{tpu_custom_call.1} parent=11 // pred_region
          %s269 = ssub.s32 8192, 8192
          %270 = vsyncadd [#allocation9], %s269
          %s271 = sshll.u32 [#allocation8], 4
          %s272 = int_to_ptr.vmem [resolvable:$true] %s271
          %277 = dma.hbm_to_vmem [thread:$0]  %s4, 8192, %s272, [#allocation9], 256, 256, 16
        $region28: #{tpu_custom_call.1} parent=11 // pred_fallthru
          _
        // Predicated region
        $region29: #{tpu_custom_call.1} parent=11 // pred_check
          %p278 = pneg %p153
        $region30: #{tpu_custom_call.1} parent=11 // pred_check_branch
          %280 = sbr.rel (%p278) target = $region32
        $region31: #{tpu_custom_call.1} parent=11 // pred_region
          _
        $region32: #{tpu_custom_call.1} parent=11 // pred_fallthru
          _
        // Predicated region
        $region33: #{tpu_custom_call.1} parent=11 // pred_check
          %p281 = pneg %p174
        $region34: #{tpu_custom_call.1} parent=11 // pred_check_branch
          %283 = sbr.rel (%p281) target = $region36
        $region35: #{tpu_custom_call.1} parent=11 // pred_region
          %s285 = ssub.s32 512, 512
          %286 = vsyncadd [#allocation9], %s285
          %s287 = sshll.u32 [#allocation10], 4
          %s288 = int_to_ptr.vmem [resolvable:$true] %s287
          %293 = dma.hbm_to_vmem [thread:$0]  %s6, 512, %s288, [#allocation9], 256, 256, 16
        $region36: #{tpu_custom_call.1} parent=11 // pred_fallthru
          _
        // Predicated region
        $region37: #{tpu_custom_call.1} parent=11 // pred_check
          %p294 = pneg %p195
        $region38: #{tpu_custom_call.1} parent=11 // pred_check_branch
          %296 = sbr.rel (%p294) target = $region40
        $region39: #{tpu_custom_call.1} parent=11 // pred_region
          _
        $region40: #{tpu_custom_call.1} parent=11 // pred_fallthru
          _
      $region12: #{tpu_custom_call.1} parent=5 // pred_fallthru
        _
      %p297 = scmp.lt.s32.totalorder %s22, 2
      // Predicated region
      $region41: #{tpu_custom_call.1} parent=5 // pred_check
        %p298 = pneg %p297
      $region42: #{tpu_custom_call.1} parent=5 // pred_check_branch
        %300 = sbr.rel (%p298) target = $region44
      $region43: #{tpu_custom_call.1} parent=5 // pred_region
        // Predicated region
        $region45: #{tpu_custom_call.1} parent=43 // pred_check
          %p301 = pneg %p42
        $region46: #{tpu_custom_call.1} parent=43 // pred_check_branch
          %303 = sbr.rel (%p301) target = $region48
        $region47: #{tpu_custom_call.1} parent=43 // pred_region
          %s304 = sand.u32 %s32, 1
          %s305 = scalar_lea.sflag [#allocation3], %s304
          %s306 = sand.u32 %s32, 1
          %s307 = smul.addr %s306, 16
          %s308 = scalar_lea.vmem [#allocation2], %s307
          %s310 = ssub.s32 256, 256
          %311 = vsyncadd %s305, %s310
          %s312 = smul.addr %s22, 2
          %s313 = smul.addr %s312, 128
          %s314 = scalar_lea.hbm %s0, %s313
          %s316 = sshll.u32 %s308, 4
          %s317 = int_to_ptr.vmem [resolvable:$true] %s316
          %319 = dma.hbm_to_vmem [thread:$0]  %s314, 256, %s317, %s305
        $region48: #{tpu_custom_call.1} parent=43 // pred_fallthru
          _
      $region44: #{tpu_custom_call.1} parent=5 // pred_fallthru
        _
      %p320 = scmp.le.s32.totalorder 1, %s22
      %p321 = scmp.lt.s32.totalorder %s22, 3
      %p322 = pnand %p320, %p321
      %p323 = pneg %p322
      // Predicated region
      $region49: #{tpu_custom_call.1} parent=5 // pred_check
        _
      $region50: #{tpu_custom_call.1} parent=5 // pred_check_branch
        %325 = sbr.rel (%p322) target = $region52
      $region51: #{tpu_custom_call.1} parent=5 // pred_region
        %s326 = ssub.s32 %s22, 1
        %s327 = sand.u32 %s35, 1
        %s328 = scalar_lea.sflag [#allocation3], %s327
        %s329 = sand.u32 %s35, 1
        %s330 = smul.addr %s329, 16
        %s331 = scalar_lea.vmem [#allocation2], %s330
        // Predicated region
        $region53: #{tpu_custom_call.1} parent=51 // pred_check
          %p332 = pneg %p48
        $region54: #{tpu_custom_call.1} parent=51 // pred_check_branch
          %334 = sbr.rel (%p332) target = $region56
        $region55: #{tpu_custom_call.1} parent=51 // pred_region
          %335 = dma.done %s328, 256
        $region56: #{tpu_custom_call.1} parent=51 // pred_fallthru
          _
        // Predicated region
        $region57: #{tpu_custom_call.1} parent=51 // pred_check
          %p336 = pneg %p69
        $region58: #{tpu_custom_call.1} parent=51 // pred_check_branch
          %338 = sbr.rel (%p336) target = $region60
        $region59: #{tpu_custom_call.1} parent=51 // pred_region
          %339 = dma.done [#allocation6], 256
        $region60: #{tpu_custom_call.1} parent=51 // pred_fallthru
          _
        // Predicated region
        $region61: #{tpu_custom_call.1} parent=51 // pred_check
          %p340 = pneg %p90
        $region62: #{tpu_custom_call.1} parent=51 // pred_check_branch
          %342 = sbr.rel (%p340) target = $region64
        $region63: #{tpu_custom_call.1} parent=51 // pred_region
          %343 = dma.done [#allocation6], 512
        $region64: #{tpu_custom_call.1} parent=51 // pred_fallthru
          _
        // Predicated region
        $region65: #{tpu_custom_call.1} parent=51 // pred_check
          %p344 = pneg %p132
        $region66: #{tpu_custom_call.1} parent=51 // pred_check_branch
          %346 = sbr.rel (%p344) target = $region68
        $region67: #{tpu_custom_call.1} parent=51 // pred_region
          %347 = dma.done [#allocation9], 8192
        $region68: #{tpu_custom_call.1} parent=51 // pred_fallthru
          _
        // Predicated region
        $region69: #{tpu_custom_call.1} parent=51 // pred_check
          %p348 = pneg %p174
        $region70: #{tpu_custom_call.1} parent=51 // pred_check_branch
          %350 = sbr.rel (%p348) target = $region72
        $region71: #{tpu_custom_call.1} parent=51 // pred_region
          %351 = dma.done [#allocation9], 512
        $region72: #{tpu_custom_call.1} parent=51 // pred_fallthru
          _
        %s352 = sand.u32 %s35, 1
        %s353 = scalar_lea.sflag [#allocation3], %s352
        %s354 = sand.u32 %s35, 1
        %s355 = smul.addr %s354, 16
        %s356 = scalar_lea.vmem [#allocation2], %s355
        %p357 = pneg %p48
        %p358 = pneg %p45
        %p359 = pneg %p69
        %p360 = pneg %p66
        %p361 = pneg %p90
        %p362 = pneg %p87
        %p363 = pneg %p111
        %p364 = pneg %p108
        %p365 = pneg %p132
        %p366 = pneg %p129
        %p367 = pneg %p153
        %p368 = pneg %p150
        %p369 = pneg %p174
        %p370 = pneg %p171
        %p371 = pneg %p195
        %p372 = pneg %p192
        %p373 = pneg %p221
        %p374 = pneg %p218
        %s375 = sand.u32 %s208, 1
        %s376 = scalar_lea.sflag [#allocation4], %s375
        %s377 = sand.u32 %s208, 1
        %s378 = smul.addr %s377, 16
        %s379 = scalar_lea.vmem [#allocation11], %s378
        %v380 = vld [vmem:[%s331] sm:$0xff]
        %v381 = vld [vmem:[%s331 + $0x8] sm:$0xff]
        %v382 = vld [vmem:[#allocation5] sm:$0xff]
        %s383 = scalar_lea.vmem [#allocation5], 8
        %v384 = vld [vmem:[%s383] sm:$0xff]
        %v385 = vld [vmem:[#allocation7] sm:$0xff]
        %v386 = vld [vmem:[#allocation7 + $0x8] sm:$0xff]
        %v387 = vld [vmem:[#allocation7 + $0x10] sm:$0x1]
        %v388 = vld [vmem:[#allocation7 + $0x18] sm:$0x1]
        %v389 = vld [vmem:[#allocation10] sm:$0xff]
        %v390 = vld [vmem:[#allocation10 + $0x8] sm:$0xff]
        %v391 = vld [vmem:[#allocation10 + $0x10] sm:$0x1]
        %v392 = vld [vmem:[#allocation10 + $0x18] sm:$0x1]
        %vm393 = vcmask 64512
        %v395 = vsel %vm393, %v382, 0
        %397 = vmatprep.subr.mxu0 %v381
        %398 = vmatpush1.msra.mxu0 %v380
        %399 = vmatprep.subr.mxu0 0.0
        %400 = vmatpush1.msra.mxu0 0.0
        %401 = vmatprep.subr.mxu0 0.0
        %402 = vmatpush1.msra.mxu0 0.0
        %403 = vmatprep.subr.mxu0 0.0
        %404 = vmatpush1.msra.mxu0 0.0
        %405 = vmatprep.subr.mxu0 0.0
        %406 = vmatpush1.msra.mxu0 0.0
        %407 = vmatprep.subr.mxu0 0.0
        %408 = vmatpush1.msra.mxu0 0.0
        %409 = vmatprep.subr.mxu0 0.0
        %410 = vmatpush1.msra.mxu0 0.0
        %411 = vmatprep.subr.mxu0 0.0
        %412 = vmatpush1.msra.mxu0 0.0
        %413 = vmatprep.subr.mxu0 0.0
        %414 = vmatpush1.msra.mxu0 0.0
        %415 = vmatprep.subr.mxu0 0.0
        %416 = vmatpush1.msra.mxu0 0.0
        %417 = vmatprep.subr.mxu0 0.0
        %418 = vmatpush1.msra.mxu0 0.0
        %419 = vmatprep.subr.mxu0 0.0
        %420 = vmatpush1.msra.mxu0 0.0
        %421 = vmatprep.subr.mxu0 0.0
        %422 = vmatpush1.msra.mxu0 0.0
        %423 = vmatprep.subr.mxu0 0.0
        %424 = vmatpush1.msra.mxu0 0.0
        %425 = vmatprep.subr.mxu0 0.0
        %426 = vmatpush1.msra.mxu0 0.0
        %427 = vmatprep.subr.mxu0 0.0
        %428 = vmatpush1.msra.mxu0 0.0
        %429 = vmatprep.subr.mxu0 0.0
        %430 = vmatpush1.msra.mxu0 0.0
        %431 = vmatprep.subr.mxu0 0.0
        %432 = vmatpush1.msra.mxu0 0.0
        %433 = vmatprep.subr.mxu0 0.0
        %434 = vmatpush1.msra.mxu0 0.0
        %435 = vmatprep.subr.mxu0 0.0
        %436 = vmatpush1.msra.mxu0 0.0
        %437 = vmatprep.subr.mxu0 0.0
        %438 = vmatpush1.msra.mxu0 0.0
        %439 = vmatprep.subr.mxu0 0.0
        %440 = vmatpush1.msra.mxu0 0.0
        %441 = vmatprep.subr.mxu0 0.0
        %442 = vmatpush1.msra.mxu0 0.0
        %443 = vmatprep.subr.mxu0 0.0
        %444 = vmatpush1.msra.mxu0 0.0
        %445 = vmatprep.subr.mxu0 0.0
        %446 = vmatpush1.msra.mxu0 0.0
        %447 = vmatprep.subr.mxu0 0.0
        %448 = vmatpush1.msra.mxu0 0.0
        %449 = vmatprep.subr.mxu0 0.0
        %450 = vmatpush1.msra.mxu0 0.0
        %451 = vmatprep.subr.mxu0 0.0
        %452 = vmatpush1.msra.mxu0 0.0
        %453 = vmatprep.subr.mxu0 0.0
        %454 = vmatpush1.msra.mxu0 0.0
        %455 = vmatprep.subr.mxu0 0.0
        %456 = vmatpush1.msra.mxu0 0.0
        %457 = vmatprep.subr.mxu0 0.0
        %458 = vmatpush1.msra.mxu0 0.0
        %459 = vmatprep.subr.mxu0 0.0
        %460 = vmatpush1.msra.mxu0 0.0
        %461 = vmatprep.mubr.f32.mxu0 0.0
        %462 = vmatmul.mubr.f32.gmra.mrb[0].mxu0 %v395
        %v463 = vpop.f32.mrb[0].mxu0
        %v464 = vadd.f32 0.0, %v463
        %v465 = vpop.f32.mrb[0].mxu0
        %v466 = vadd.f32 0.0, %v465
        %467 = vdwg.mxu0
        %v469 = vsel %vm393, %v384, 0
        %471 = vmatprep.subr.mxu0 %v381
        %472 = vmatpush1.msra.mxu0 %v380
        %473 = vmatprep.subr.mxu0 0.0
        %474 = vmatpush1.msra.mxu0 0.0
        %475 = vmatprep.subr.mxu0 0.0
        %476 = vmatpush1.msra.mxu0 0.0
        %477 = vmatprep.subr.mxu0 0.0
        %478 = vmatpush1.msra.mxu0 0.0
        %479 = vmatprep.subr.mxu0 0.0
        %480 = vmatpush1.msra.mxu0 0.0
        %481 = vmatprep.subr.mxu0 0.0
        %482 = vmatpush1.msra.mxu0 0.0
        %483 = vmatprep.subr.mxu0 0.0
        %484 = vmatpush1.msra.mxu0 0.0
        %485 = vmatprep.subr.mxu0 0.0
        %486 = vmatpush1.msra.mxu0 0.0
        %487 = vmatprep.subr.mxu0 0.0
        %488 = vmatpush1.msra.mxu0 0.0
        %489 = vmatprep.subr.mxu0 0.0
        %490 = vmatpush1.msra.mxu0 0.0
        %491 = vmatprep.subr.mxu0 0.0
        %492 = vmatpush1.msra.mxu0 0.0
        %493 = vmatprep.subr.mxu0 0.0
        %494 = vmatpush1.msra.mxu0 0.0
        %495 = vmatprep.subr.mxu0 0.0
        %496 = vmatpush1.msra.mxu0 0.0
        %497 = vmatprep.subr.mxu0 0.0
        %498 = vmatpush1.msra.mxu0 0.0
        %499 = vmatprep.subr.mxu0 0.0
        %500 = vmatpush1.msra.mxu0 0.0
        %501 = vmatprep.subr.mxu0 0.0
        %502 = vmatpush1.msra.mxu0 0.0
        %503 = vmatprep.subr.mxu0 0.0
        %504 = vmatpush1.msra.mxu0 0.0
        %505 = vmatprep.subr.mxu0 0.0
        %506 = vmatpush1.msra.mxu0 0.0
        %507 = vmatprep.subr.mxu0 0.0
        %508 = vmatpush1.msra.mxu0 0.0
        %509 = vmatprep.subr.mxu0 0.0
        %510 = vmatpush1.msra.mxu0 0.0
        %511 = vmatprep.subr.mxu0 0.0
        %512 = vmatpush1.msra.mxu0 0.0
        %513 = vmatprep.subr.mxu0 0.0
        %514 = vmatpush1.msra.mxu0 0.0
        %515 = vmatprep.subr.mxu0 0.0
        %516 = vmatpush1.msra.mxu0 0.0
        %517 = vmatprep.subr.mxu0 0.0
        %518 = vmatpush1.msra.mxu0 0.0
        %519 = vmatprep.subr.mxu0 0.0
        %520 = vmatpush1.msra.mxu0 0.0
        %521 = vmatprep.subr.mxu0 0.0
        %522 = vmatpush1.msra.mxu0 0.0
        %523 = vmatprep.subr.mxu0 0.0
        %524 = vmatpush1.msra.mxu0 0.0
        %525 = vmatprep.subr.mxu0 0.0
        %526 = vmatpush1.msra.mxu0 0.0
        %527 = vmatprep.subr.mxu0 0.0
        %528 = vmatpush1.msra.mxu0 0.0
        %529 = vmatprep.subr.mxu0 0.0
        %530 = vmatpush1.msra.mxu0 0.0
        %531 = vmatprep.subr.mxu0 0.0
        %532 = vmatpush1.msra.mxu0 0.0
        %533 = vmatprep.subr.mxu0 0.0
        %534 = vmatpush1.msra.mxu0 0.0
        %535 = vmatprep.mubr.f32.mxu0 0.0
        %536 = vmatmul.mubr.f32.gmra.mrb[0].mxu0 %v469
        %v537 = vpop.f32.mrb[0].mxu0
        %v538 = vadd.f32 0.0, %v537
        %v539 = vpop.f32.mrb[0].mxu0
        %v540 = vadd.f32 0.0, %v539
        %541 = vdwg.mxu0
        %544 = vrot.lane.b32.xlu0 %v464, 32
        %v545 = vpop.permute.xlu0 %544
        %546 = vrot.lane.b32.xlu0 %v466, 32
        %v547 = vpop.permute.xlu0 %546
        %vm548 = vcmask 261120
        %v549 = vsel %vm548, %v545, %v547
        %v552 = vsel %vm548, 0.0, %v545
        %553 = vrot.lane.b32.xlu0 %v464, 96
        %v554 = vpop.permute.xlu0 %553
        %555 = vrot.lane.b32.xlu0 %v466, 96
        %v556 = vpop.permute.xlu0 %555
        %vm557 = vcmask 785408
        %v558 = vsel %vm557, %v554, %v556
        %v561 = vsel %vm557, %v556, 0.0
        %v562 = vlaneseq
        %v563 = vshrl.u32 %v562, 7
        %v564 = vsub.s32 0, %v563
        %v565 = vrot.slane %v385, %v564
        %v566 = vlaneseq
        %v567 = vshrl.u32 %v566, 7
        %v568 = vsub.s32 0, %v567
        %v569 = vrot.slane %v386, %v568
        %v570 = vmul.f32 %v552, %v565
        %v571 = vmul.f32 %v549, %v569
        %v572 = vlaneseq
        %v573 = vshrl.u32 %v572, 7
        %v574 = vsub.s32 1, %v573
        %v575 = vrot.slane %v385, %v574
        %v576 = vlaneseq
        %v577 = vshrl.u32 %v576, 7
        %v578 = vsub.s32 1, %v577
        %v579 = vrot.slane %v386, %v578
        %v580 = vmul.f32 %v464, %v575
        %v581 = vmul.f32 %v466, %v579
        %v582 = vadd.f32 %v570, %v580
        %v583 = vadd.f32 %v571, %v581
        %v584 = vlaneseq
        %v585 = vshrl.u32 %v584, 7
        %v586 = vsub.s32 2, %v585
        %v587 = vrot.slane %v385, %v586
        %v588 = vlaneseq
        %v589 = vshrl.u32 %v588, 7
        %v590 = vsub.s32 2, %v589
        %v591 = vrot.slane %v386, %v590
        %v592 = vmul.f32 %v558, %v587
        %v593 = vmul.f32 %v561, %v591
        %v594 = vadd.f32 %v582, %v592
        %v595 = vadd.f32 %v583, %v593
        %598 = vrot.lane.b32.xlu0 %v380, 32
        %v599 = vpop.permute.xlu0 %598
        %600 = vrot.lane.b32.xlu0 %v381, 32
        %v601 = vpop.permute.xlu0 %600
        %v602 = vsel %vm548, %v599, %v601
        %v605 = vsel %vm548, 0.0, %v599
        %606 = vrot.lane.b32.xlu0 %v380, 96
        %v607 = vpop.permute.xlu0 %606
        %608 = vrot.lane.b32.xlu0 %v381, 96
        %v609 = vpop.permute.xlu0 %608
        %v610 = vsel %vm557, %v607, %v609
        %v613 = vsel %vm557, %v609, 0.0
        %v614 = vlaneseq
        %v615 = vshrl.u32 %v614, 7
        %v616 = vsub.s32 3, %v615
        %v617 = vrot.slane %v385, %v616
        %v618 = vlaneseq
        %v619 = vshrl.u32 %v618, 7
        %v620 = vsub.s32 3, %v619
        %v621 = vrot.slane %v386, %v620
        %v622 = vmul.f32 %v605, %v617
        %v623 = vmul.f32 %v602, %v621
        %v624 = vlaneseq
        %v625 = vshrl.u32 %v624, 7
        %v626 = vsub.s32 4, %v625
        %v627 = vrot.slane %v385, %v626
        %v628 = vlaneseq
        %v629 = vshrl.u32 %v628, 7
        %v630 = vsub.s32 4, %v629
        %v631 = vrot.slane %v386, %v630
        %v632 = vmul.f32 %v380, %v627
        %v633 = vmul.f32 %v381, %v631
        %v634 = vadd.f32 %v622, %v632
        %v635 = vadd.f32 %v623, %v633
        %v636 = vlaneseq
        %v637 = vshrl.u32 %v636, 7
        %v638 = vsub.s32 5, %v637
        %v639 = vrot.slane %v385, %v638
        %v640 = vlaneseq
        %v641 = vshrl.u32 %v640, 7
        %v642 = vsub.s32 5, %v641
        %v643 = vrot.slane %v386, %v642
        %v644 = vmul.f32 %v610, %v639
        %v645 = vmul.f32 %v613, %v643
        %v646 = vadd.f32 %v634, %v644
        %v647 = vadd.f32 %v635, %v645
        %v648 = vadd.f32 %v594, %v646
        %v649 = vadd.f32 %v595, %v647
        %652 = vrot.lane.b32.xlu0 %v538, 32
        %v653 = vpop.permute.xlu0 %652
        %654 = vrot.lane.b32.xlu0 %v540, 32
        %v655 = vpop.permute.xlu0 %654
        %v656 = vsel %vm548, %v653, %v655
        %v659 = vsel %vm548, 0.0, %v653
        %660 = vrot.lane.b32.xlu0 %v538, 96
        %v661 = vpop.permute.xlu0 %660
        %662 = vrot.lane.b32.xlu0 %v540, 96
        %v663 = vpop.permute.xlu0 %662
        %v664 = vsel %vm557, %v661, %v663
        %v667 = vsel %vm557, %v663, 0.0
        %v668 = vlaneseq
        %v669 = vshrl.u32 %v668, 7
        %v670 = vsub.s32 6, %v669
        %v671 = vrot.slane %v385, %v670
        %v672 = vlaneseq
        %v673 = vshrl.u32 %v672, 7
        %v674 = vsub.s32 6, %v673
        %v675 = vrot.slane %v386, %v674
        %v676 = vmul.f32 %v659, %v671
        %v677 = vmul.f32 %v656, %v675
        %v678 = vlaneseq
        %v679 = vshrl.u32 %v678, 7
        %v680 = vsub.s32 7, %v679
        %v681 = vrot.slane %v385, %v680
        %v682 = vlaneseq
        %v683 = vshrl.u32 %v682, 7
        %v684 = vsub.s32 7, %v683
        %v685 = vrot.slane %v386, %v684
        %v686 = vmul.f32 %v538, %v681
        %v687 = vmul.f32 %v540, %v685
        %v688 = vadd.f32 %v676, %v686
        %v689 = vadd.f32 %v677, %v687
        %v690 = vlaneseq
        %v691 = vshrl.u32 %v690, 7
        %v692 = vsub.s32 0, %v691
        %v693 = vrot.slane %v387, %v692
        %v694 = vlaneseq
        %v695 = vshrl.u32 %v694, 7
        %v696 = vsub.s32 0, %v695
        %v697 = vrot.slane %v388, %v696
        %v698 = vmul.f32 %v664, %v693
        %v699 = vmul.f32 %v667, %v697
        %v700 = vadd.f32 %v688, %v698
        %v701 = vadd.f32 %v689, %v699
        %v702 = vadd.f32 %v648, %v700
        %v703 = vadd.f32 %v649, %v701
        %v704 = vld [vmem:[%s3] sm:$0x3]
        %v706 = vlaneseq
        %v707 = vshrl.u32 %v706, 7
        %v708 = vsub.s32 0, %v707
        %v709 = vrot.slane %v704, %v708
        %v710 = vlaneseq
        %v711 = vshrl.u32 %v710, 7
        %v712 = vsub.s32 1, %v711
        %v713 = vrot.slane %v704, %v712
        %v716 = vadd.f32 %v702, %v709
        %v717 = vadd.f32 %v703, %v713
        %v718 = vmax.f32 %v716, 0.0
        %v719 = vmax.f32 %v717, 0.0
        %v720 = vmin.f32 %v718, 6.0
        %v721 = vmin.f32 %v719, 6.0
        %v722 = vld [vmem:[#allocation8] sm:$0xff]
        %v723 = vld [vmem:[#allocation8 + $0x8] sm:$0xff]
        %v724 = vld [vmem:[#allocation8 + $0x10] sm:$0xff]
        %v725 = vld [vmem:[#allocation8 + $0x18] sm:$0xff]
        %v726 = vld [vmem:[#allocation8 + $0x20] sm:$0xff]
        %v727 = vld [vmem:[#allocation8 + $0x28] sm:$0xff]
        %v728 = vld [vmem:[#allocation8 + $0x30] sm:$0xff]
        %v729 = vld [vmem:[#allocation8 + $0x38] sm:$0xff]
        %v730 = vld [vmem:[#allocation8 + $0x40] sm:$0xff]
        %v731 = vld [vmem:[#allocation8 + $0x48] sm:$0xff]
        %v732 = vld [vmem:[#allocation8 + $0x50] sm:$0xff]
        %v733 = vld [vmem:[#allocation8 + $0x58] sm:$0xff]
        %v734 = vld [vmem:[#allocation8 + $0x60] sm:$0xff]
        %v735 = vld [vmem:[#allocation8 + $0x68] sm:$0xff]
        %v736 = vld [vmem:[#allocation8 + $0x70] sm:$0xff]
        %v737 = vld [vmem:[#allocation8 + $0x78] sm:$0xff]
        %v738 = vld [vmem:[#allocation8 + $0x80] sm:$0xff]
        %v739 = vld [vmem:[#allocation8 + $0x88] sm:$0xff]
        %v740 = vld [vmem:[#allocation8 + $0x90] sm:$0xff]
        %v741 = vld [vmem:[#allocation8 + $0x98] sm:$0xff]
        %v742 = vld [vmem:[#allocation8 + $0xa0] sm:$0xff]
        %v743 = vld [vmem:[#allocation8 + $0xa8] sm:$0xff]
        %v744 = vld [vmem:[#allocation8 + $0xb0] sm:$0xff]
        %v745 = vld [vmem:[#allocation8 + $0xb8] sm:$0xff]
        %v746 = vld [vmem:[#allocation8 + $0xc0] sm:$0xff]
        %v747 = vld [vmem:[#allocation8 + $0xc8] sm:$0xff]
        %v748 = vld [vmem:[#allocation8 + $0xd0] sm:$0xff]
        %v749 = vld [vmem:[#allocation8 + $0xd8] sm:$0xff]
        %v750 = vld [vmem:[#allocation8 + $0xe0] sm:$0xff]
        %v751 = vld [vmem:[#allocation8 + $0xe8] sm:$0xff]
        %v752 = vld [vmem:[#allocation8 + $0xf0] sm:$0xff]
        %v753 = vld [vmem:[#allocation8 + $0xf8] sm:$0xff]
        %v754 = vld [vmem:[#allocation8 + $0x100] sm:$0xff]
        %v755 = vld [vmem:[#allocation8 + $0x108] sm:$0xff]
        %v756 = vld [vmem:[#allocation8 + $0x110] sm:$0xff]
        %v757 = vld [vmem:[#allocation8 + $0x118] sm:$0xff]
        %v758 = vld [vmem:[#allocation8 + $0x120] sm:$0xff]
        %v759 = vld [vmem:[#allocation8 + $0x128] sm:$0xff]
        %v760 = vld [vmem:[#allocation8 + $0x130] sm:$0xff]
        %v761 = vld [vmem:[#allocation8 + $0x138] sm:$0xff]
        %v762 = vld [vmem:[#allocation8 + $0x140] sm:$0xff]
        %v763 = vld [vmem:[#allocation8 + $0x148] sm:$0xff]
        %v764 = vld [vmem:[#allocation8 + $0x150] sm:$0xff]
        %v765 = vld [vmem:[#allocation8 + $0x158] sm:$0xff]
        %v766 = vld [vmem:[#allocation8 + $0x160] sm:$0xff]
        %v767 = vld [vmem:[#allocation8 + $0x168] sm:$0xff]
        %v768 = vld [vmem:[#allocation8 + $0x170] sm:$0xff]
        %v769 = vld [vmem:[#allocation8 + $0x178] sm:$0xff]
        %v770 = vld [vmem:[#allocation8 + $0x180] sm:$0xff]
        %v771 = vld [vmem:[#allocation8 + $0x188] sm:$0xff]
        %v772 = vld [vmem:[#allocation8 + $0x190] sm:$0xff]
        %v773 = vld [vmem:[#allocation8 + $0x198] sm:$0xff]
        %v774 = vld [vmem:[#allocation8 + $0x1a0] sm:$0xff]
        %v775 = vld [vmem:[#allocation8 + $0x1a8] sm:$0xff]
        %v776 = vld [vmem:[#allocation8 + $0x1b0] sm:$0xff]
        %v777 = vld [vmem:[#allocation8 + $0x1b8] sm:$0xff]
        %v778 = vld [vmem:[#allocation8 + $0x1c0] sm:$0xff]
        %v779 = vld [vmem:[#allocation8 + $0x1c8] sm:$0xff]
        %v780 = vld [vmem:[#allocation8 + $0x1d0] sm:$0xff]
        %v781 = vld [vmem:[#allocation8 + $0x1d8] sm:$0xff]
        %v782 = vld [vmem:[#allocation8 + $0x1e0] sm:$0xff]
        %v783 = vld [vmem:[#allocation8 + $0x1e8] sm:$0xff]
        %v784 = vld [vmem:[#allocation8 + $0x1f0] sm:$0xff]
        %v785 = vld [vmem:[#allocation8 + $0x1f8] sm:$0xff]
        %v786 = vld [vmem:[%s5] sm:$0x3]
        %v788 = vlaneseq
        %v789 = vshrl.u32 %v788, 7
        %v790 = vsub.s32 0, %v789
        %v791 = vrot.slane %v786, %v790
        %v792 = vlaneseq
        %v793 = vshrl.u32 %v792, 7
        %v794 = vsub.s32 1, %v793
        %v795 = vrot.slane %v786, %v794
        %798 = vmatprep.subr.mxu0 %v723
        %799 = vmatpush1.msra.mxu0 %v722
        %800 = vmatprep.subr.mxu0 %v725
        %801 = vmatpush1.msra.mxu0 %v724
        %802 = vmatprep.subr.mxu0 %v727
        %803 = vmatpush1.msra.mxu0 %v726
        %804 = vmatprep.subr.mxu0 %v729
        %805 = vmatpush1.msra.mxu0 %v728
        %806 = vmatprep.subr.mxu0 %v731
        %807 = vmatpush1.msra.mxu0 %v730
        %808 = vmatprep.subr.mxu0 %v733
        %809 = vmatpush1.msra.mxu0 %v732
        %810 = vmatprep.subr.mxu0 %v735
        %811 = vmatpush1.msra.mxu0 %v734
        %812 = vmatprep.subr.mxu0 %v737
        %813 = vmatpush1.msra.mxu0 %v736
        %814 = vmatprep.subr.mxu0 %v739
        %815 = vmatpush1.msra.mxu0 %v738
        %816 = vmatprep.subr.mxu0 %v741
        %817 = vmatpush1.msra.mxu0 %v740
        %818 = vmatprep.subr.mxu0 %v743
        %819 = vmatpush1.msra.mxu0 %v742
        %820 = vmatprep.subr.mxu0 %v745
        %821 = vmatpush1.msra.mxu0 %v744
        %822 = vmatprep.subr.mxu0 %v747
        %823 = vmatpush1.msra.mxu0 %v746
        %824 = vmatprep.subr.mxu0 %v749
        %825 = vmatpush1.msra.mxu0 %v748
        %826 = vmatprep.subr.mxu0 %v751
        %827 = vmatpush1.msra.mxu0 %v750
        %828 = vmatprep.subr.mxu0 %v753
        %829 = vmatpush1.msra.mxu0 %v752
        %830 = vmatprep.subr.mxu0 %v755
        %831 = vmatpush1.msra.mxu0 %v754
        %832 = vmatprep.subr.mxu0 %v757
        %833 = vmatpush1.msra.mxu0 %v756
        %834 = vmatprep.subr.mxu0 %v759
        %835 = vmatpush1.msra.mxu0 %v758
        %836 = vmatprep.subr.mxu0 %v761
        %837 = vmatpush1.msra.mxu0 %v760
        %838 = vmatprep.subr.mxu0 %v763
        %839 = vmatpush1.msra.mxu0 %v762
        %840 = vmatprep.subr.mxu0 %v765
        %841 = vmatpush1.msra.mxu0 %v764
        %842 = vmatprep.subr.mxu0 %v767
        %843 = vmatpush1.msra.mxu0 %v766
        %844 = vmatprep.subr.mxu0 %v769
        %845 = vmatpush1.msra.mxu0 %v768
        %846 = vmatprep.subr.mxu0 %v771
        %847 = vmatpush1.msra.mxu0 %v770
        %848 = vmatprep.subr.mxu0 %v773
        %849 = vmatpush1.msra.mxu0 %v772
        %850 = vmatprep.subr.mxu0 %v775
        %851 = vmatpush1.msra.mxu0 %v774
        %852 = vmatprep.subr.mxu0 %v777
        %853 = vmatpush1.msra.mxu0 %v776
        %854 = vmatprep.subr.mxu0 %v779
        %855 = vmatpush1.msra.mxu0 %v778
        %856 = vmatprep.subr.mxu0 %v781
        %857 = vmatpush1.msra.mxu0 %v780
        %858 = vmatprep.subr.mxu0 %v783
        %859 = vmatpush1.msra.mxu0 %v782
        %860 = vmatprep.subr.mxu0 %v785
        %861 = vmatpush1.msra.mxu0 %v784
        %862 = vmatprep.mubr.f32.mxu0 %v721
        %863 = vmatmul.mubr.f32.gmra.mrb[0].mxu0 %v720
        %v864 = vpop.f32.mrb[0].mxu0
        %v865 = vadd.f32 %v791, %v864
        %v866 = vpop.f32.mrb[0].mxu0
        %v867 = vadd.f32 %v795, %v866
        %868 = vdwg.mxu0
        %v869 = vmax.f32 %v865, 0.0
        %v870 = vmax.f32 %v867, 0.0
        %v871 = vmin.f32 %v869, 6.0
        %v872 = vmin.f32 %v870, 6.0
        %873 = vmatprep.subr.mxu0 %v872
        %874 = vmatpush1.msra.mxu0 %v871
        %875 = vmatprep.subr.mxu0 0.0
        %876 = vmatpush1.msra.mxu0 0.0
        %877 = vmatprep.subr.mxu0 0.0
        %878 = vmatpush1.msra.mxu0 0.0
        %879 = vmatprep.subr.mxu0 0.0
        %880 = vmatpush1.msra.mxu0 0.0
        %881 = vmatprep.subr.mxu0 0.0
        %882 = vmatpush1.msra.mxu0 0.0
        %883 = vmatprep.subr.mxu0 0.0
        %884 = vmatpush1.msra.mxu0 0.0
        %885 = vmatprep.subr.mxu0 0.0
        %886 = vmatpush1.msra.mxu0 0.0
        %887 = vmatprep.subr.mxu0 0.0
        %888 = vmatpush1.msra.mxu0 0.0
        %889 = vmatprep.subr.mxu0 0.0
        %890 = vmatpush1.msra.mxu0 0.0
        %891 = vmatprep.subr.mxu0 0.0
        %892 = vmatpush1.msra.mxu0 0.0
        %893 = vmatprep.subr.mxu0 0.0
        %894 = vmatpush1.msra.mxu0 0.0
        %895 = vmatprep.subr.mxu0 0.0
        %896 = vmatpush1.msra.mxu0 0.0
        %897 = vmatprep.subr.mxu0 0.0
        %898 = vmatpush1.msra.mxu0 0.0
        %899 = vmatprep.subr.mxu0 0.0
        %900 = vmatpush1.msra.mxu0 0.0
        %901 = vmatprep.subr.mxu0 0.0
        %902 = vmatpush1.msra.mxu0 0.0
        %903 = vmatprep.subr.mxu0 0.0
        %904 = vmatpush1.msra.mxu0 0.0
        %905 = vmatprep.subr.mxu0 0.0
        %906 = vmatpush1.msra.mxu0 0.0
        %907 = vmatprep.subr.mxu0 0.0
        %908 = vmatpush1.msra.mxu0 0.0
        %909 = vmatprep.subr.mxu0 0.0
        %910 = vmatpush1.msra.mxu0 0.0
        %911 = vmatprep.subr.mxu0 0.0
        %912 = vmatpush1.msra.mxu0 0.0
        %913 = vmatprep.subr.mxu0 0.0
        %914 = vmatpush1.msra.mxu0 0.0
        %915 = vmatprep.subr.mxu0 0.0
        %916 = vmatpush1.msra.mxu0 0.0
        %917 = vmatprep.subr.mxu0 0.0
        %918 = vmatpush1.msra.mxu0 0.0
        %919 = vmatprep.subr.mxu0 0.0
        %920 = vmatpush1.msra.mxu0 0.0
        %921 = vmatprep.subr.mxu0 0.0
        %922 = vmatpush1.msra.mxu0 0.0
        %923 = vmatprep.subr.mxu0 0.0
        %924 = vmatpush1.msra.mxu0 0.0
        %925 = vmatprep.subr.mxu0 0.0
        %926 = vmatpush1.msra.mxu0 0.0
        %927 = vmatprep.subr.mxu0 0.0
        %928 = vmatpush1.msra.mxu0 0.0
        %929 = vmatprep.subr.mxu0 0.0
        %930 = vmatpush1.msra.mxu0 0.0
        %931 = vmatprep.subr.mxu0 0.0
        %932 = vmatpush1.msra.mxu0 0.0
        %933 = vmatprep.subr.mxu0 0.0
        %934 = vmatpush1.msra.mxu0 0.0
        %935 = vmatprep.subr.mxu0 0.0
        %936 = vmatpush1.msra.mxu0 0.0
        %937 = vmatprep.mubr.f32.mxu0 0.0
        %938 = vmatmul.mubr.f32.gmra.mrb[0].mxu0 %v395
        %v939 = vpop.f32.mrb[0].mxu0
        %v940 = vadd.f32 0.0, %v939
        %v941 = vpop.f32.mrb[0].mxu0
        %v942 = vadd.f32 0.0, %v941
        %943 = vdwg.mxu0
        %944 = vmatprep.subr.mxu0 %v872
        %945 = vmatpush1.msra.mxu0 %v871
        %946 = vmatprep.subr.mxu0 0.0
        %947 = vmatpush1.msra.mxu0 0.0
        %948 = vmatprep.subr.mxu0 0.0
        %949 = vmatpush1.msra.mxu0 0.0
        %950 = vmatprep.subr.mxu0 0.0
        %951 = vmatpush1.msra.mxu0 0.0
        %952 = vmatprep.subr.mxu0 0.0
        %953 = vmatpush1.msra.mxu0 0.0
        %954 = vmatprep.subr.mxu0 0.0
        %955 = vmatpush1.msra.mxu0 0.0
        %956 = vmatprep.subr.mxu0 0.0
        %957 = vmatpush1.msra.mxu0 0.0
        %958 = vmatprep.subr.mxu0 0.0
        %959 = vmatpush1.msra.mxu0 0.0
        %960 = vmatprep.subr.mxu0 0.0
        %961 = vmatpush1.msra.mxu0 0.0
        %962 = vmatprep.subr.mxu0 0.0
        %963 = vmatpush1.msra.mxu0 0.0
        %964 = vmatprep.subr.mxu0 0.0
        %965 = vmatpush1.msra.mxu0 0.0
        %966 = vmatprep.subr.mxu0 0.0
        %967 = vmatpush1.msra.mxu0 0.0
        %968 = vmatprep.subr.mxu0 0.0
        %969 = vmatpush1.msra.mxu0 0.0
        %970 = vmatprep.subr.mxu0 0.0
        %971 = vmatpush1.msra.mxu0 0.0
        %972 = vmatprep.subr.mxu0 0.0
        %973 = vmatpush1.msra.mxu0 0.0
        %974 = vmatprep.subr.mxu0 0.0
        %975 = vmatpush1.msra.mxu0 0.0
        %976 = vmatprep.subr.mxu0 0.0
        %977 = vmatpush1.msra.mxu0 0.0
        %978 = vmatprep.subr.mxu0 0.0
        %979 = vmatpush1.msra.mxu0 0.0
        %980 = vmatprep.subr.mxu0 0.0
        %981 = vmatpush1.msra.mxu0 0.0
        %982 = vmatprep.subr.mxu0 0.0
        %983 = vmatpush1.msra.mxu0 0.0
        %984 = vmatprep.subr.mxu0 0.0
        %985 = vmatpush1.msra.mxu0 0.0
        %986 = vmatprep.subr.mxu0 0.0
        %987 = vmatpush1.msra.mxu0 0.0
        %988 = vmatprep.subr.mxu0 0.0
        %989 = vmatpush1.msra.mxu0 0.0
        %990 = vmatprep.subr.mxu0 0.0
        %991 = vmatpush1.msra.mxu0 0.0
        %992 = vmatprep.subr.mxu0 0.0
        %993 = vmatpush1.msra.mxu0 0.0
        %994 = vmatprep.subr.mxu0 0.0
        %995 = vmatpush1.msra.mxu0 0.0
        %996 = vmatprep.subr.mxu0 0.0
        %997 = vmatpush1.msra.mxu0 0.0
        %998 = vmatprep.subr.mxu0 0.0
        %999 = vmatpush1.msra.mxu0 0.0
        %1000 = vmatprep.subr.mxu0 0.0
        %1001 = vmatpush1.msra.mxu0 0.0
        %1002 = vmatprep.subr.mxu0 0.0
        %1003 = vmatpush1.msra.mxu0 0.0
        %1004 = vmatprep.subr.mxu0 0.0
        %1005 = vmatpush1.msra.mxu0 0.0
        %1006 = vmatprep.subr.mxu0 0.0
        %1007 = vmatpush1.msra.mxu0 0.0
        %1008 = vmatprep.mubr.f32.mxu0 0.0
        %1009 = vmatmul.mubr.f32.gmra.mrb[0].mxu0 %v469
        %v1010 = vpop.f32.mrb[0].mxu0
        %v1011 = vadd.f32 0.0, %v1010
        %v1012 = vpop.f32.mrb[0].mxu0
        %v1013 = vadd.f32 0.0, %v1012
        %1014 = vdwg.mxu0
        %1017 = vrot.lane.b32.xlu0 %v940, 32
        %v1018 = vpop.permute.xlu0 %1017
        %1019 = vrot.lane.b32.xlu0 %v942, 32
        %v1020 = vpop.permute.xlu0 %1019
        %v1021 = vsel %vm548, %v1018, %v1020
        %v1024 = vsel %vm548, 0.0, %v1018
        %1025 = vrot.lane.b32.xlu0 %v940, 96
        %v1026 = vpop.permute.xlu0 %1025
        %1027 = vrot.lane.b32.xlu0 %v942, 96
        %v1028 = vpop.permute.xlu0 %1027
        %v1029 = vsel %vm557, %v1026, %v1028
        %v1032 = vsel %vm557, %v1028, 0.0
        %v1033 = vlaneseq
        %v1034 = vshrl.u32 %v1033, 7
        %v1035 = vsub.s32 0, %v1034
        %v1036 = vrot.slane %v389, %v1035
        %v1037 = vlaneseq
        %v1038 = vshrl.u32 %v1037, 7
        %v1039 = vsub.s32 0, %v1038
        %v1040 = vrot.slane %v390, %v1039
        %v1041 = vmul.f32 %v1024, %v1036
        %v1042 = vmul.f32 %v1021, %v1040
        %v1043 = vlaneseq
        %v1044 = vshrl.u32 %v1043, 7
        %v1045 = vsub.s32 1, %v1044
        %v1046 = vrot.slane %v389, %v1045
        %v1047 = vlaneseq
        %v1048 = vshrl.u32 %v1047, 7
        %v1049 = vsub.s32 1, %v1048
        %v1050 = vrot.slane %v390, %v1049
        %v1051 = vmul.f32 %v940, %v1046
        %v1052 = vmul.f32 %v942, %v1050
        %v1053 = vadd.f32 %v1041, %v1051
        %v1054 = vadd.f32 %v1042, %v1052
        %v1055 = vlaneseq
        %v1056 = vshrl.u32 %v1055, 7
        %v1057 = vsub.s32 2, %v1056
        %v1058 = vrot.slane %v389, %v1057
        %v1059 = vlaneseq
        %v1060 = vshrl.u32 %v1059, 7
        %v1061 = vsub.s32 2, %v1060
        %v1062 = vrot.slane %v390, %v1061
        %v1063 = vmul.f32 %v1029, %v1058
        %v1064 = vmul.f32 %v1032, %v1062
        %v1065 = vadd.f32 %v1053, %v1063
        %v1066 = vadd.f32 %v1054, %v1064
        %1069 = vrot.lane.b32.xlu0 %v871, 32
        %v1070 = vpop.permute.xlu0 %1069
        %1071 = vrot.lane.b32.xlu0 %v872, 32
        %v1072 = vpop.permute.xlu0 %1071
        %v1073 = vsel %vm548, %v1070, %v1072
        %v1076 = vsel %vm548, 0.0, %v1070
        %1077 = vrot.lane.b32.xlu0 %v871, 96
        %v1078 = vpop.permute.xlu0 %1077
        %1079 = vrot.lane.b32.xlu0 %v872, 96
        %v1080 = vpop.permute.xlu0 %1079
        %v1081 = vsel %vm557, %v1078, %v1080
        %v1084 = vsel %vm557, %v1080, 0.0
        %v1085 = vlaneseq
        %v1086 = vshrl.u32 %v1085, 7
        %v1087 = vsub.s32 3, %v1086
        %v1088 = vrot.slane %v389, %v1087
        %v1089 = vlaneseq
        %v1090 = vshrl.u32 %v1089, 7
        %v1091 = vsub.s32 3, %v1090
        %v1092 = vrot.slane %v390, %v1091
        %v1093 = vmul.f32 %v1076, %v1088
        %v1094 = vmul.f32 %v1073, %v1092
        %v1095 = vlaneseq
        %v1096 = vshrl.u32 %v1095, 7
        %v1097 = vsub.s32 4, %v1096
        %v1098 = vrot.slane %v389, %v1097
        %v1099 = vlaneseq
        %v1100 = vshrl.u32 %v1099, 7
        %v1101 = vsub.s32 4, %v1100
        %v1102 = vrot.slane %v390, %v1101
        %v1103 = vmul.f32 %v871, %v1098
        %v1104 = vmul.f32 %v872, %v1102
        %v1105 = vadd.f32 %v1093, %v1103
        %v1106 = vadd.f32 %v1094, %v1104
        %v1107 = vlaneseq
        %v1108 = vshrl.u32 %v1107, 7
        %v1109 = vsub.s32 5, %v1108
        %v1110 = vrot.slane %v389, %v1109
        %v1111 = vlaneseq
        %v1112 = vshrl.u32 %v1111, 7
        %v1113 = vsub.s32 5, %v1112
        %v1114 = vrot.slane %v390, %v1113
        %v1115 = vmul.f32 %v1081, %v1110
        %v1116 = vmul.f32 %v1084, %v1114
        %v1117 = vadd.f32 %v1105, %v1115
        %v1118 = vadd.f32 %v1106, %v1116
        %v1119 = vadd.f32 %v1065, %v1117
        %v1120 = vadd.f32 %v1066, %v1118
        %1123 = vrot.lane.b32.xlu0 %v1011, 32
        %v1124 = vpop.permute.xlu0 %1123
        %1125 = vrot.lane.b32.xlu0 %v1013, 32
        %v1126 = vpop.permute.xlu0 %1125
        %v1127 = vsel %vm548, %v1124, %v1126
        %v1130 = vsel %vm548, 0.0, %v1124
        %1131 = vrot.lane.b32.xlu0 %v1011, 96
        %v1132 = vpop.permute.xlu0 %1131
        %1133 = vrot.lane.b32.xlu0 %v1013, 96
        %v1134 = vpop.permute.xlu0 %1133
        %v1135 = vsel %vm557, %v1132, %v1134
        %v1138 = vsel %vm557, %v1134, 0.0
        %v1139 = vlaneseq
        %v1140 = vshrl.u32 %v1139, 7
        %v1141 = vsub.s32 6, %v1140
        %v1142 = vrot.slane %v389, %v1141
        %v1143 = vlaneseq
        %v1144 = vshrl.u32 %v1143, 7
        %v1145 = vsub.s32 6, %v1144
        %v1146 = vrot.slane %v390, %v1145
        %v1147 = vmul.f32 %v1130, %v1142
        %v1148 = vmul.f32 %v1127, %v1146
        %v1149 = vlaneseq
        %v1150 = vshrl.u32 %v1149, 7
        %v1151 = vsub.s32 7, %v1150
        %v1152 = vrot.slane %v389, %v1151
        %v1153 = vlaneseq
        %v1154 = vshrl.u32 %v1153, 7
        %v1155 = vsub.s32 7, %v1154
        %v1156 = vrot.slane %v390, %v1155
        %v1157 = vmul.f32 %v1011, %v1152
        %v1158 = vmul.f32 %v1013, %v1156
        %v1159 = vadd.f32 %v1147, %v1157
        %v1160 = vadd.f32 %v1148, %v1158
        %v1161 = vlaneseq
        %v1162 = vshrl.u32 %v1161, 7
        %v1163 = vsub.s32 0, %v1162
        %v1164 = vrot.slane %v391, %v1163
        %v1165 = vlaneseq
        %v1166 = vshrl.u32 %v1165, 7
        %v1167 = vsub.s32 0, %v1166
        %v1168 = vrot.slane %v392, %v1167
        %v1169 = vmul.f32 %v1135, %v1164
        %v1170 = vmul.f32 %v1138, %v1168
        %v1171 = vadd.f32 %v1159, %v1169
        %v1172 = vadd.f32 %v1160, %v1170
        %v1173 = vadd.f32 %v1119, %v1171
        %v1174 = vadd.f32 %v1120, %v1172
        %v1175 = vld [vmem:[%s7] sm:$0x3]
        %v1177 = vlaneseq
        %v1178 = vshrl.u32 %v1177, 7
        %v1179 = vsub.s32 0, %v1178
        %v1180 = vrot.slane %v1175, %v1179
        %v1181 = vlaneseq
        %v1182 = vshrl.u32 %v1181, 7
        %v1183 = vsub.s32 1, %v1182
        %v1184 = vrot.slane %v1175, %v1183
        %v1187 = vadd.f32 %v1173, %v1180
        %v1188 = vadd.f32 %v1174, %v1184
        %v1189 = vadd.f32 %v380, %v1187
        %v1190 = vadd.f32 %v381, %v1188
        %1191 = vst [vmem:[%s379] sm:$0xff] %v1189
        %1192 = vst [vmem:[%s379 + $0x8] sm:$0xff] %v1190
        %s1193 = sand.u32 %s208, 1
        %s1194 = scalar_lea.sflag [#allocation4], %s1193
        %s1195 = sand.u32 %s208, 1
        %s1196 = smul.addr %s1195, 16
        %s1197 = scalar_lea.vmem [#allocation11], %s1196
        // Predicated region
        $region73: #{tpu_custom_call.1} parent=51 // pred_check
          %p1198 = pneg %p218
        $region74: #{tpu_custom_call.1} parent=51 // pred_check_branch
          %1200 = sbr.rel (%p1198) target = $region76
        $region75: #{tpu_custom_call.1} parent=51 // pred_region
          %s1202 = ssub.s32 256, 256
          %1203 = vsyncadd %s1194, %s1202
          %s1204 = smul.addr %s27, 2
          %s1205 = smul.addr %s1204, 128
          %s1206 = scalar_lea.hbm %s8, %s1205
          %s1208 = sshll.u32 %s1197, 4
          %s1209 = int_to_ptr.vmem [resolvable:$true] %s1208
          %1211 = dma.vmem_to_hbm [thread:$0]  %s1209, 256, %s1206, %s1194
        $region76: #{tpu_custom_call.1} parent=51 // pred_fallthru
          _
      $region52: #{tpu_custom_call.1} parent=5 // pred_fallthru
        _
      %p1212 = scmp.le.s32.totalorder 2, %s22
      // Predicated region
      $region77: #{tpu_custom_call.1} parent=5 // pred_check
        %p1213 = pneg %p1212
      $region78: #{tpu_custom_call.1} parent=5 // pred_check_branch
        %1215 = sbr.rel (%p1213) target = $region80
      $region79: #{tpu_custom_call.1} parent=5 // pred_region
        %s1216 = ssub.s32 %s22, 2
        // Predicated region
        $region81: #{tpu_custom_call.1} parent=79 // pred_check
          %p1217 = pneg %p224
        $region82: #{tpu_custom_call.1} parent=79 // pred_check_branch
          %1219 = sbr.rel (%p1217) target = $region84
        $region83: #{tpu_custom_call.1} parent=79 // pred_region
          %s1220 = sand.u32 %s209, 1
          %s1221 = scalar_lea.sflag [#allocation4], %s1220
          %s1222 = sand.u32 %s209, 1
          %s1223 = smul.addr %s1222, 16
          %s1224 = scalar_lea.vmem [#allocation11], %s1223
          %1225 = dma.done %s1221, 256
        $region84: #{tpu_custom_call.1} parent=79 // pred_fallthru
          _
      $region80: #{tpu_custom_call.1} parent=5 // pred_fallthru
        _
    $region6: #{tpu_custom_call.1} parent=1 // loop_footer
      %s26 = sadd.s32 1, %s22
    $region7: #{tpu_custom_call.1} parent=1 // loop_footer_branch
      %21 = sbr.rel target = $region3
    $region8: #{tpu_custom_call.1} parent=1 // loop_exit
      _
    %1226 = vsyncpa [#allocation3], 1
    %s1227 = scalar_lea.sflag [#allocation3], 1
    %1228 = vsyncpa %s1227, 1
    %1229 = vsyncpa [#allocation6], 1
    %1230 = vsyncpa [#allocation9], 1
    %1231 = vsyncpa [#allocation4], 1
    %s1232 = scalar_lea.sflag [#allocation4], 1
    %1233 = vsyncpa %s1232, 1

</llo_original>
